<compile_context>
chip_gen: v7x
topology: tpu7x:2x2x1
jax: 0.10.0
libtpu: 0.0.40
codegen_flags: <defaults>
</compile_context>

<pallas_src>
import jax
import jax.numpy as jnp
import numpy as np
from jax import lax
from jax.experimental import pallas as pl
from jax.experimental.pallas import tpu as pltpu


def _round_up(x, m):
    return ((x + m - 1) // m) * m


def _pick_vmem_limit(resident_bytes):
    """Scoped-VMEM limit derived from the footprint, clamped to [32 MiB, 3/4 * physical]."""
    try:
        cap = int(pltpu.get_tpu_info().vmem_capacity_bytes)
    except Exception:
        cap = 64 * 1024 * 1024  # conservative fallback: v7x per-TensorCore VMEM
    return int(min(max(resident_bytes + (8 << 20), 32 << 20), (cap * 3) // 4))


def fm_kernel(idx_ref, table_ref, out_ref):
    """One batch tile of the FM second-order interaction.

    idx_ref   : (F, TB)   int32     field-major indices (per-field offsets folded in)
    table_ref : (Dp, Vp)  f32/bf16  rows [0:D] = emb.T, row Dp-1 = sum_d emb**2, rest 0
    out_ref   : (1, TB)   f32       lane-dense output slab
    """
    num_fields, tb = idx_ref.shape
    dp, vp = table_ref.shape

    idx = idx_ref[...]                                           # (F, TB) int32
    iota_v = lax.broadcasted_iota(jnp.int32, (vp, tb), 0)        # vocab id per sublane

    # counts[v, b] = #{f : idx[f, b] == v}.  F is tiny & static -> unrolled
    # compare+add on a single (Vp, TB) tile, accumulated in int32 with ONE final
    # cast to the matmul dtype.  (Padded batch columns have idx == 0 for every
    # field and produce garbage that the wrapper slices off.)
    counts_i = jnp.zeros((vp, tb), jnp.int32)
    for f in range(num_fields):
        counts_i = counts_i + (iota_v == idx[f:f + 1, :]).astype(jnp.int32)
    counts = counts_i.astype(jnp.float32).astype(table_ref.dtype)

    # One MXU matmul: rows [0:D] of m are s_d = sum_f emb_d, row Dp-1 is
    # ssq = sum_f sum_d emb_d**2, all other rows are exactly zero (zero pad).
    m = jnp.dot(table_ref[...], counts,
                preferred_element_type=jnp.float32)              # (Dp, TB) f32

    ssq = m[dp - 1:dp, :]                                        # (1, TB)
    # sum over sublanes of m^2 = sum_d s_d^2 + ssq^2  ->  correct for the extra
    # ssq^2 term and subtract ssq to get the FM second-order value.
    row_sq = jnp.sum(m * m, axis=0, keepdims=True)               # (1, TB)
    out_ref[...] = 0.5 * (row_sq - ssq * ssq - ssq)


def fm_layer_forward(x_idx, offsets, emb_table, *, batch_tile=256,
                     use_bf16_matmul=False):
    """FM second-order term 0.5 * sum_d[(sum_f e)^2 - sum_f e^2] -> (B,) float32."""
    B, F = x_idx.shape
    V, D = emb_table.shape
    compute_dtype = jnp.bfloat16 if use_bf16_matmul else jnp.float32

    # Fold the (static) per-field offsets into the indices on the host and go
    # field-major so the batch dimension sits on the lane axis inside the kernel.
    # NOTE: like torch.nn.Embedding, out-of-range raw indices are not checked in
    # the kernel; they silently select a zero-padded (or wrong) table row.
    idx_t = (x_idx.astype(jnp.int32) + offsets.astype(jnp.int32)[None, :]).T  # (F, B)

    # Single (Dp, Vp) table: emb.T in rows [0:D], per-row sum of squares in the
    # last padded row.  Zero padding contributes nothing to the FM sums.
    Vp = _round_up(V, 128)
    Dp = _round_up(D + 1, 128)          # +1 guarantees a spare sum-of-squares row
    emb32 = emb_table.astype(jnp.float32)
    table = jnp.zeros((Dp, Vp), jnp.float32)
    table = table.at[:D, :V].set(emb32.T)
    table = table.at[Dp - 1, :V].set(jnp.sum(emb32 * emb32, axis=1))
    table = table.astype(compute_dtype)

    # Pad batch to the tile size; padded columns produce garbage outputs that are
    # sliced off below and never touch out[:B].
    Bp = _round_up(B, batch_tile)
    if Bp != B:
        idx_t = jnp.pad(idx_t, ((0, 0), (0, Bp - B)))

    # Derive the scoped-VMEM limit from the footprint instead of hard-coding it.
    itemsize = jnp.dtype(compute_dtype).itemsize
    resident = (2 * Dp * Vp * itemsize                  # table (worst case 2 bufs)
                + 2 * batch_tile * (F + 1) * 4          # idx + out tiles, 2 bufs
                + batch_tile * (Vp + Dp) * 4)           # counts + m intermediates
    vmem_limit = _pick_vmem_limit(resident)

    def build(table_spec):
        return pl.pallas_call(
            fm_kernel,
            out_shape=jax.ShapeDtypeStruct((1, Bp), jnp.float32),
            grid=(Bp // batch_tile,),
            in_specs=[
                pl.BlockSpec((F, batch_tile), lambda i: (0, i)),
                table_spec,
            ],
            out_specs=pl.BlockSpec((1, batch_tile), lambda i: (0, i)),
            compiler_params=pltpu.CompilerParams(
                dimension_semantics=("parallel",),
                vmem_limit_bytes=vmem_limit,
            ),
        )

    # Constant index_map keeps the table resident in VMEM across batch tiles;
    # Buffered(1) drops the (useless) second pipeline buffer for it.  Fall back
    # to the default double-buffered spec on versions without pipeline_mode.
    try:
        table_spec = pl.BlockSpec((Dp, Vp), lambda i: (0, 0),
                                  pipeline_mode=pl.Buffered(1))
        out = build(table_spec)(idx_t, table)
    except Exception:
        out = build(pl.BlockSpec((Dp, Vp), lambda i: (0, 0)))(idx_t, table)

    return out[0, :B]


def reference_forward(x_idx, offsets, emb_table):
    # Pure-JAX reference matching the PyTorch FMLayer semantics.
    idx = x_idx + offsets[None, :]                              # (B, F)
    emb = emb_table[idx]                                        # (B, F, D)
    square_of_sum = jnp.sum(emb, axis=1) ** 2
    sum_of_square = jnp.sum(emb ** 2, axis=1)
    return 0.5 * jnp.sum(square_of_sum - sum_of_square, axis=1)


if __name__ == "__main__":
    # Synthetic, deterministic setup (no checkpoint loading).
    field_dims = [10, 20, 30, 15]    # num_fields = 4, vocab = 75
    factor_dim = 16
    batch = 300                      # pads to 512 -> 2 grid steps of 256

    vocab = sum(field_dims)
    offsets = jnp.asarray(
        np.concatenate([[0], np.cumsum(field_dims)[:-1]]).astype(np.int32))  # (F,)

    key = jax.random.PRNGKey(0)
    k_emb, k_idx = jax.random.split(key)

    # Xavier-uniform init of the embedding weight, matching _initialize_weights.
    bound = float(np.sqrt(6.0 / (vocab + factor_dim)))
    emb_table = jax.random.uniform(
        k_emb, (vocab, factor_dim), dtype=jnp.float32, minval=-bound, maxval=bound)

    # Label-encoded inputs: per-field index in [0, field_dim).
    cols = []
    for fd in field_dims:
        k_idx, sub = jax.random.split(k_idx)
        cols.append(jax.random.randint(sub, (batch,), 0, fd, dtype=jnp.int32))
    x_idx = jnp.stack(cols, axis=1)                              # (B, F) int32

    ref = reference_forward(x_idx, offsets, emb_table)

    # f32 MXU path (bit-accurate vs. reference).
    out = fm_layer_forward(x_idx, offsets, emb_table)
    out = jax.block_until_ready(out)
    np.testing.assert_allclose(np.asarray(out), np.asarray(ref),
                               rtol=1e-5, atol=1e-5)

    # bf16 MXU path (~2x MXU throughput; table loses mantissa -> loose tolerance).
    out_bf16 = fm_layer_forward(x_idx, offsets, emb_table, use_bf16_matmul=True)
    out_bf16 = jax.block_until_ready(out_bf16)
    np.testing.assert_allclose(np.asarray(out_bf16), np.asarray(ref),
                               rtol=5e-2, atol=5e-2)

    print("KERNEL_OK")
</pallas_src>

<mosaic_0001>
module attributes {stable_mosaic.version = 11 : i64} {
  func.func @fm_kernel(%arg0: i32, %arg1: memref<4x256xi32, #tpu.memory_space<vmem>>, %arg2: memref<128x128xf32, #tpu.memory_space<vmem>>, %arg3: memref<1x256xf32, #tpu.memory_space<vmem>>) attributes {dimension_semantics = [#tpu.dimension_semantics<parallel>], iteration_bounds = array<i64: 2>, scalar_prefetch = 0 : i64, scratch_operands = 0 : i64, tpu.core_type = #tpu.core_type<tc>, window_params = [{transform_indices = @transform_0, window_bounds = array<i64: 4, 256>}, {pipeline_mode = #tpu.pipeline_mode<synchronous>, transform_indices = @transform_1, window_bounds = array<i64: 128, 128>}, {transform_indices = @transform_2, window_bounds = array<i64: 1, 256>}]} {
    %c0 = arith.constant 0 : index
    %c0_0 = arith.constant 0 : index
    %0 = vector.load %arg1[%c0, %c0_0] : memref<4x256xi32, #tpu.memory_space<vmem>>, vector<4x256xi32>
    %1 = tpu.iota {dimensions = array<i32: 0>} : vector<128x256xi32>
    %c0_i32 = arith.constant 0 : i32
    %2 = vector.broadcast %c0_i32 : i32 to vector<128x256xi32>
    %3 = vector.extract_strided_slice %0 {offsets = [0, 0], sizes = [1, 256], strides = [1, 1]} : vector<4x256xi32> to vector<1x256xi32>
    %4 = vector.broadcast %3 : vector<1x256xi32> to vector<128x256xi32>
    %5 = arith.cmpi eq, %1, %4 : vector<128x256xi32>
    %6 = arith.extui %5 : vector<128x256xi1> to vector<128x256xi32>
    %7 = arith.addi %2, %6 : vector<128x256xi32>
    %8 = vector.extract_strided_slice %0 {offsets = [1, 0], sizes = [1, 256], strides = [1, 1]} : vector<4x256xi32> to vector<1x256xi32>
    %9 = vector.broadcast %8 : vector<1x256xi32> to vector<128x256xi32>
    %10 = arith.cmpi eq, %1, %9 : vector<128x256xi32>
    %11 = arith.extui %10 : vector<128x256xi1> to vector<128x256xi32>
    %12 = arith.addi %7, %11 : vector<128x256xi32>
    %13 = vector.extract_strided_slice %0 {offsets = [2, 0], sizes = [1, 256], strides = [1, 1]} : vector<4x256xi32> to vector<1x256xi32>
    %14 = vector.broadcast %13 : vector<1x256xi32> to vector<128x256xi32>
    %15 = arith.cmpi eq, %1, %14 : vector<128x256xi32>
    %16 = arith.extui %15 : vector<128x256xi1> to vector<128x256xi32>
    %17 = arith.addi %12, %16 : vector<128x256xi32>
    %18 = vector.extract_strided_slice %0 {offsets = [3, 0], sizes = [1, 256], strides = [1, 1]} : vector<4x256xi32> to vector<1x256xi32>
    %19 = vector.broadcast %18 : vector<1x256xi32> to vector<128x256xi32>
    %20 = arith.cmpi eq, %1, %19 : vector<128x256xi32>
    %21 = arith.extui %20 : vector<128x256xi1> to vector<128x256xi32>
    %22 = arith.addi %17, %21 : vector<128x256xi32>
    %23 = arith.sitofp %22 : vector<128x256xi32> to vector<128x256xf32>
    %c0_1 = arith.constant 0 : index
    %c0_2 = arith.constant 0 : index
    %24 = vector.load %arg2[%c0_1, %c0_2] : memref<128x128xf32, #tpu.memory_space<vmem>>, vector<128x128xf32>
    %cst = arith.constant dense<0.000000e+00> : vector<128x256xf32>
    %25 = tpu.matmul %24, %23, %cst {dimension_numbers = #tpu.dot_dimension_numbers<[1], [0], [0], [1], [0, 0, 1, 1], [], []>} : vector<128x128xf32>, vector<128x256xf32>, vector<128x256xf32> -> vector<128x256xf32>
    %26 = vector.extract_strided_slice %25 {offsets = [127, 0], sizes = [1, 256], strides = [1, 1]} : vector<128x256xf32> to vector<1x256xf32>
    %27 = arith.mulf %25, %25 : vector<128x256xf32>
    %cst_3 = arith.constant dense<0.000000e+00> : vector<256xf32>
    %28 = vector.multi_reduction <add>, %27, %cst_3 [0] : vector<128x256xf32> to vector<256xf32>
    %29 = vector.shape_cast %28 : vector<256xf32> to vector<1x256xf32>
    %30 = arith.mulf %26, %26 : vector<1x256xf32>
    %31 = arith.subf %29, %30 : vector<1x256xf32>
    %32 = arith.subf %31, %26 : vector<1x256xf32>
    %cst_4 = arith.constant 5.000000e-01 : f32
    %33 = vector.broadcast %cst_4 : f32 to vector<1x256xf32>
    %34 = arith.mulf %33, %32 : vector<1x256xf32>
    %c0_5 = arith.constant 0 : index
    %c0_6 = arith.constant 0 : index
    %35 = vector.load %arg3[%c0_5, %c0_6] : memref<1x256xf32, #tpu.memory_space<vmem>>, vector<1x256xf32>
    tpu.vector_store %arg3[%c0_5, %c0_6], %34 {strides = array<i32>} : memref<1x256xf32, #tpu.memory_space<vmem>>, vector<1x256xf32>,
    return
  }
  func.func @transform_0(%arg0: i32) -> (i32, i32) {
    %c0_i32 = arith.constant 0 : i32
    %c0_i32_0 = arith.constant 0 : i32
    return %c0_i32, %arg0 : i32, i32
  }
  func.func @transform_1(%arg0: i32) -> (i32, i32) {
    %c0_i32 = arith.constant 0 : i32
    %c0_i32_0 = arith.constant 0 : i32
    %c0_i32_1 = arith.constant 0 : i32
    return %c0_i32, %c0_i32_0 : i32, i32
  }
  func.func @transform_2(%arg0: i32) -> (i32, i32) {
    %c0_i32 = arith.constant 0 : i32
    %c0_i32_0 = arith.constant 0 : i32
    return %c0_i32, %arg0 : i32, i32
  }
}

module attributes {stable_mosaic.version = 11 : i64} {
  func.func @fm_kernel(%arg0: i32, %arg1: memref<4x256xi32, #tpu.memory_space<vmem>>, %arg2: memref<128x128xf32, #tpu.memory_space<vmem>>, %arg3: memref<1x256xf32, #tpu.memory_space<vmem>>) attributes {dimension_semantics = [#tpu.dimension_semantics<parallel>], iteration_bounds = array<i64: 2>, scalar_prefetch = 0 : i64, scratch_operands = 0 : i64, tpu.core_type = #tpu.core_type<tc>, window_params = [{transform_indices = @transform_0, window_bounds = array<i64: 4, 256>}, {pipeline_mode = #tpu.pipeline_mode<synchronous>, transform_indices = @transform_1, window_bounds = array<i64: 128, 128>}, {transform_indices = @transform_2, window_bounds = array<i64: 1, 256>}]} {
    %c0 = arith.constant 0 : index
    %c0_0 = arith.constant 0 : index
    %0 = vector.load %arg1[%c0, %c0_0] : memref<4x256xi32, #tpu.memory_space<vmem>>, vector<4x256xi32>
    %1 = tpu.iota {dimensions = array<i32: 0>} : vector<128x256xi32>
    %c0_i32 = arith.constant 0 : i32
    %2 = vector.broadcast %c0_i32 : i32 to vector<128x256xi32>
    %3 = vector.extract_strided_slice %0 {offsets = [0, 0], sizes = [1, 256], strides = [1, 1]} : vector<4x256xi32> to vector<1x256xi32>
    %4 = vector.broadcast %3 : vector<1x256xi32> to vector<128x256xi32>
    %5 = arith.cmpi eq, %1, %4 : vector<128x256xi32>
    %6 = arith.extui %5 : vector<128x256xi1> to vector<128x256xi32>
    %7 = arith.addi %2, %6 : vector<128x256xi32>
    %8 = vector.extract_strided_slice %0 {offsets = [1, 0], sizes = [1, 256], strides = [1, 1]} : vector<4x256xi32> to vector<1x256xi32>
    %9 = vector.broadcast %8 : vector<1x256xi32> to vector<128x256xi32>
    %10 = arith.cmpi eq, %1, %9 : vector<128x256xi32>
    %11 = arith.extui %10 : vector<128x256xi1> to vector<128x256xi32>
    %12 = arith.addi %7, %11 : vector<128x256xi32>
    %13 = vector.extract_strided_slice %0 {offsets = [2, 0], sizes = [1, 256], strides = [1, 1]} : vector<4x256xi32> to vector<1x256xi32>
    %14 = vector.broadcast %13 : vector<1x256xi32> to vector<128x256xi32>
    %15 = arith.cmpi eq, %1, %14 : vector<128x256xi32>
    %16 = arith.extui %15 : vector<128x256xi1> to vector<128x256xi32>
    %17 = arith.addi %12, %16 : vector<128x256xi32>
    %18 = vector.extract_strided_slice %0 {offsets = [3, 0], sizes = [1, 256], strides = [1, 1]} : vector<4x256xi32> to vector<1x256xi32>
    %19 = vector.broadcast %18 : vector<1x256xi32> to vector<128x256xi32>
    %20 = arith.cmpi eq, %1, %19 : vector<128x256xi32>
    %21 = arith.extui %20 : vector<128x256xi1> to vector<128x256xi32>
    %22 = arith.addi %17, %21 : vector<128x256xi32>
    %23 = arith.sitofp %22 : vector<128x256xi32> to vector<128x256xf32>
    %c0_1 = arith.constant 0 : index
    %c0_2 = arith.constant 0 : index
    %24 = vector.load %arg2[%c0_1, %c0_2] : memref<128x128xf32, #tpu.memory_space<vmem>>, vector<128x128xf32>
    %cst = arith.constant dense<0.000000e+00> : vector<128x256xf32>
    %25 = tpu.matmul %24, %23, %cst {dimension_numbers = #tpu.dot_dimension_numbers<[1], [0], [0], [1], [0, 0, 1, 1], [], []>} : vector<128x128xf32>, vector<128x256xf32>, vector<128x256xf32> -> vector<128x256xf32>
    %26 = vector.extract_strided_slice %25 {offsets = [127, 0], sizes = [1, 256], strides = [1, 1]} : vector<128x256xf32> to vector<1x256xf32>
    %27 = arith.mulf %25, %25 : vector<128x256xf32>
    %cst_3 = arith.constant dense<0.000000e+00> : vector<256xf32>
    %28 = vector.multi_reduction <add>, %27, %cst_3 [0] : vector<128x256xf32> to vector<256xf32>
    %29 = vector.shape_cast %28 : vector<256xf32> to vector<1x256xf32>
    %30 = arith.mulf %26, %26 : vector<1x256xf32>
    %31 = arith.subf %29, %30 : vector<1x256xf32>
    %32 = arith.subf %31, %26 : vector<1x256xf32>
    %cst_4 = arith.constant 5.000000e-01 : f32
    %33 = vector.broadcast %cst_4 : f32 to vector<1x256xf32>
    %34 = arith.mulf %33, %32 : vector<1x256xf32>
    %c0_5 = arith.constant 0 : index
    %c0_6 = arith.constant 0 : index
    %35 = vector.load %arg3[%c0_5, %c0_6] : memref<1x256xf32, #tpu.memory_space<vmem>>, vector<1x256xf32>
    tpu.vector_store %arg3[%c0_5, %c0_6], %34 {strides = array<i32>} : memref<1x256xf32, #tpu.memory_space<vmem>>, vector<1x256xf32>,
    return
  }
  func.func @transform_0(%arg0: i32) -> (i32, i32) {
    %c0_i32 = arith.constant 0 : i32
    %c0_i32_0 = arith.constant 0 : i32
    return %c0_i32, %arg0 : i32, i32
  }
  func.func @transform_1(%arg0: i32) -> (i32, i32) {
    %c0_i32 = arith.constant 0 : i32
    %c0_i32_0 = arith.constant 0 : i32
    %c0_i32_1 = arith.constant 0 : i32
    return %c0_i32, %c0_i32_0 : i32, i32
  }
  func.func @transform_2(%arg0: i32) -> (i32, i32) {
    %c0_i32 = arith.constant 0 : i32
    %c0_i32_0 = arith.constant 0 : i32
    return %c0_i32, %arg0 : i32, i32
  }
}

</mosaic_0001>

<llo_original>
// kernel: tpu_custom_call.1
$region0: #{tpu_custom_call.1}
  #allocation0 [shape = 'u32[]', space=smem, size = 0x4, offset = 0x4, fixed_abs, tag = 'smem constant byte address 0x4 - core index']
  #allocation1 [shape = 'u32[144,128]{1,0:T(1,128)}', space=vmem, size = 0x12000, scoped, tag = 'internal scratch']
  %s0 = inlined_call_operand.hbm [shape: s32[4,512], index: 0, kind: input, shape index: {}]
  %s1 = inlined_call_operand.hbm [shape: f32[128,128], index: 1, kind: input, shape index: {}]
  %s2 = inlined_call_operand.hbm [shape: f32[1,512], index: 2, kind: output, shape index: {}]
  %s3 = sld [smem:[#allocation0]]
  $region49: #{tpu_custom_call.1} parent=0
    _
  %s5 = ssub.s32 1, %s3
  %s6 = scalar_select 0, %s5, %s3
  $region1: #{tpu_custom_call.1} parent=0
    #allocation2 [shape = 'u8[8192]{0}', space=vmem, size = 0x2000, scoped, tag = 'input window, operand 0']
    #allocation3 [shape = 's32[2]{0}', space=sflag, size = 0x8, scoped, tag = 'scoped memory for tpu_custom_call.1']
    #allocation4 [shape = 's32[2]{0}', space=sflag, size = 0x8, scoped, tag = 'scoped memory for tpu_custom_call.1']
    #allocation5 [shape = 'u8[65536]{0}', space=vmem, size = 0x10000, scoped, tag = 'input window, operand 1, single buffered']
    #allocation6 [shape = 's32[1]{0}', space=sflag, size = 0x4, scoped, tag = 'scoped memory for tpu_custom_call.1']
    #allocation7 [shape = 'u8[2048]{0}', space=vmem, size = 0x800, scoped, tag = 'output window, operand 0']
    %7 = vsyncpa [#allocation3], 0
    %s8 = scalar_lea.sflag [#allocation3], 1
    %9 = vsyncpa %s8, 0
    %10 = vsyncpa [#allocation6], 0
    %11 = vsyncpa [#allocation4], 0
    %s12 = scalar_lea.sflag [#allocation4], 1
    %13 = vsyncpa %s12, 0
    loop: start=0, step=1, limit=4
    $region2: #{tpu_custom_call.1} parent=1 // loop_pre_header
      _
    $region3: #{tpu_custom_call.1} parent=1 // loop_header
      %s15 = sphi 0, %s19
      %p16 = scmp.ge.s32.totalorder %s15, 4
      %s25 = sphi 0, %s27
      %s28 = sphi 0, %s25
      %s29 = sphi 0, %s28
      %s45 = sphi 0, %s29
      %s49 = sphi 0, %s49
      %s51 = sphi 0, %s49
      %s52 = sphi 0, %s51
      %s66 = sphi 0, %s52
      %s72 = sphi 0, %s74
      %s75 = sphi 0, %s72
      %s76 = sphi 0, %s75
      %s92 = sphi 0, %s76
    $region4: #{tpu_custom_call.1} parent=1 // loop_header_branch
      %18 = sbr.rel (%p16) target = $region8
    $region5: #{tpu_custom_call.1} parent=1 // loop_body
      %s20 = ssub.s32 %s15, 1
      %s21 = ssub.s32 %s15, 2
      %s22 = sadd.s32 %s15, 1
      %s23 = ssub.s32 %s15, %s22
      %p24 = scmp.eq.s32.totalorder %s23, 0
      %s26 = sadd.s32 %s25, 1
      %s27 = scalar_select %p24, %s25, %s26
      %p30 = pneg %p24
      %p31 = scmp.eq.s32.totalorder %s15, 1
      %p32 = por %p30, %p31
      %p33 = scmp.ne.s32.totalorder %s25, %s28
      %p34 = scmp.eq.s32.totalorder %s15, 0
      %p35 = por %p33, %p34
      %p36 = scmp.ne.s32.totalorder %s25, %s28
      %p37 = scmp.eq.s32.totalorder %s20, 1
      %p38 = por %p36, %p37
      %p39 = scmp.ne.s32.totalorder %s28, %s29
      %p40 = scmp.eq.s32.totalorder %s20, 0
      %p41 = por %p39, %p40
      %p42 = scmp.ne.s32.totalorder %s28, %s29
      %p43 = scmp.eq.s32.totalorder %s21, 1
      %p44 = por %p42, %p43
      %p46 = scmp.ne.s32.totalorder %s29, %s45
      %p47 = scmp.eq.s32.totalorder %s21, 0
      %p48 = por %p46, %p47
      %s50 = sadd.s32 %s49, 1
      %p53 = scmp.eq.s32.totalorder %s15, 1
      %p54 = scmp.ne.s32.totalorder %s49, %s51
      %p55 = scmp.eq.s32.totalorder %s15, 0
      %p56 = por %p54, %p55
      %p57 = scmp.ne.s32.totalorder %s49, %s51
      %p58 = scmp.eq.s32.totalorder %s20, 1
      %p59 = por %p57, %p58
      %p60 = scmp.ne.s32.totalorder %s51, %s52
      %p61 = scmp.eq.s32.totalorder %s20, 0
      %p62 = por %p60, %p61
      %p63 = scmp.ne.s32.totalorder %s51, %s52
      %p64 = scmp.eq.s32.totalorder %s21, 1
      %p65 = por %p63, %p64
      %p67 = scmp.ne.s32.totalorder %s52, %s66
      %p68 = scmp.eq.s32.totalorder %s21, 0
      %p69 = por %p67, %p68
      %s70 = ssub.s32 %s15, %s22
      %p71 = scmp.eq.s32.totalorder %s70, 0
      %s73 = sadd.s32 %s72, 1
      %s74 = scalar_select %p71, %s72, %s73
      %p77 = pneg %p71
      %p78 = scmp.eq.s32.totalorder %s15, 1
      %p79 = por %p77, %p78
      %p80 = scmp.ne.s32.totalorder %s72, %s75
      %p81 = scmp.eq.s32.totalorder %s15, 0
      %p82 = por %p80, %p81
      %p83 = scmp.ne.s32.totalorder %s72, %s75
      %p84 = scmp.eq.s32.totalorder %s20, 1
      %p85 = por %p83, %p84
      %p86 = scmp.ne.s32.totalorder %s75, %s76
      %p87 = scmp.eq.s32.totalorder %s20, 0
      %p88 = por %p86, %p87
      %p89 = scmp.ne.s32.totalorder %s75, %s76
      %p90 = scmp.eq.s32.totalorder %s21, 1
      %p91 = por %p89, %p90
      %p93 = scmp.ne.s32.totalorder %s76, %s92
      %p94 = scmp.eq.s32.totalorder %s21, 0
      %p95 = por %p93, %p94
      %p96 = scmp.le.s32.totalorder 1, %s15
      %p97 = scmp.lt.s32.totalorder %s15, 3
      %p98 = pnand %p96, %p97
      %p99 = pneg %p98
      // Predicated region
      $region9: #{tpu_custom_call.1} parent=5 // pred_check
        _
      $region10: #{tpu_custom_call.1} parent=5 // pred_check_branch
        %101 = sbr.rel (%p98) target = $region12
      $region11: #{tpu_custom_call.1} parent=5 // pred_region
        %s102 = ssub.s32 %s15, 1
        // Predicated region
        $region13: #{tpu_custom_call.1} parent=11 // pred_check
          %p103 = pneg %p62
        $region14: #{tpu_custom_call.1} parent=11 // pred_check_branch
          %105 = sbr.rel (%p103) target = $region16
        $region15: #{tpu_custom_call.1} parent=11 // pred_region
          %s107 = ssub.s32 2048, 2048
          %108 = vsyncadd [#allocation6], %s107
          %s109 = sshll.u32 [#allocation5], 4
          %s110 = int_to_ptr.vmem [resolvable:$true] %s109
          %115 = dma.hbm_to_vmem [thread:$0]  %s1, 2048, %s110, [#allocation6], 128, 128, 8
        $region16: #{tpu_custom_call.1} parent=11 // pred_fallthru
          _
      $region12: #{tpu_custom_call.1} parent=5 // pred_fallthru
        _
      %p116 = scmp.lt.s32.totalorder %s15, 2
      // Predicated region
      $region17: #{tpu_custom_call.1} parent=5 // pred_check
        %p117 = pneg %p116
      $region18: #{tpu_custom_call.1} parent=5 // pred_check_branch
        %119 = sbr.rel (%p117) target = $region20
      $region19: #{tpu_custom_call.1} parent=5 // pred_region
        // Predicated region
        $region21: #{tpu_custom_call.1} parent=19 // pred_check
          %p120 = pneg %p35
        $region22: #{tpu_custom_call.1} parent=19 // pred_check_branch
          %122 = sbr.rel (%p120) target = $region24
        $region23: #{tpu_custom_call.1} parent=19 // pred_region
          %s123 = sand.u32 %s25, 1
          %s124 = scalar_lea.sflag [#allocation3], %s123
          %s125 = sand.u32 %s25, 1
          %s126 = smul.addr %s125, 8
          %s127 = scalar_lea.vmem [#allocation2], %s126
          %s128 = smul.u32 2, %s15
          %s130 = ssub.s32 128, 128
          %131 = vsyncadd %s124, %s130
          %s132 = smul.addr %s128, 64
          %s133 = scalar_lea.hbm %s0, %s132
          %s135 = sshll.u32 %s127, 4
          %s136 = int_to_ptr.vmem [resolvable:$true] %s135
          %138 = dma.hbm_to_vmem [thread:$0]  %s133, 128, %s136, %s124
        $region24: #{tpu_custom_call.1} parent=19 // pred_fallthru
          _
      $region20: #{tpu_custom_call.1} parent=5 // pred_fallthru
        _
      %p139 = scmp.le.s32.totalorder 1, %s15
      %p140 = scmp.lt.s32.totalorder %s15, 3
      %p141 = pnand %p139, %p140
      %p142 = pneg %p141
      // Predicated region
      $region25: #{tpu_custom_call.1} parent=5 // pred_check
        _
      $region26: #{tpu_custom_call.1} parent=5 // pred_check_branch
        %144 = sbr.rel (%p141) target = $region28
      $region27: #{tpu_custom_call.1} parent=5 // pred_region
        %s145 = ssub.s32 %s15, 1
        %s146 = sand.u32 %s28, 1
        %s147 = scalar_lea.sflag [#allocation3], %s146
        %s148 = sand.u32 %s28, 1
        %s149 = smul.addr %s148, 8
        %s150 = scalar_lea.vmem [#allocation2], %s149
        // Predicated region
        $region29: #{tpu_custom_call.1} parent=27 // pred_check
          %p151 = pneg %p41
        $region30: #{tpu_custom_call.1} parent=27 // pred_check_branch
          %153 = sbr.rel (%p151) target = $region32
        $region31: #{tpu_custom_call.1} parent=27 // pred_region
          %154 = dma.done %s147, 128
        $region32: #{tpu_custom_call.1} parent=27 // pred_fallthru
          _
        // Predicated region
        $region33: #{tpu_custom_call.1} parent=27 // pred_check
          %p155 = pneg %p62
        $region34: #{tpu_custom_call.1} parent=27 // pred_check_branch
          %157 = sbr.rel (%p155) target = $region36
        $region35: #{tpu_custom_call.1} parent=27 // pred_region
          %158 = dma.done [#allocation6], 2048
        $region36: #{tpu_custom_call.1} parent=27 // pred_fallthru
          _
        %s159 = sand.u32 %s28, 1
        %s160 = scalar_lea.sflag [#allocation3], %s159
        %s161 = sand.u32 %s28, 1
        %s162 = smul.addr %s161, 8
        %s163 = scalar_lea.vmem [#allocation2], %s162
        %p164 = pneg %p41
        %p165 = pneg %p38
        %p166 = pneg %p62
        %p167 = pneg %p59
        %p168 = pneg %p88
        %p169 = pneg %p85
        %s170 = sand.u32 %s75, 1
        %s171 = scalar_lea.sflag [#allocation4], %s170
        %s172 = sand.u32 %s75, 1
        %s173 = smul.addr %s172, 2
        %s174 = scalar_lea.vmem [#allocation7], %s173
        %s175 = smul.u32 2, %s20
        %s176 = smul.u32 2, %s20
        %v177 = vld [vmem:[%s150] sm:$0xff]
        %v178 = vlaneseq
        %v179 = vshrl.u32 %v178, 7
        %v180 = vadd.s32 %v179, 8
        %v181 = vadd.s32 %v179, 16
        %v182 = vadd.s32 %v179, 24
        %v183 = vadd.s32 %v179, 32
        %v184 = vadd.s32 %v179, 40
        %v185 = vadd.s32 %v179, 48
        %v186 = vadd.s32 %v179, 56
        %v187 = vadd.s32 %v179, 64
        %v188 = vadd.s32 %v179, 72
        %v189 = vadd.s32 %v179, 80
        %v190 = vadd.s32 %v179, 88
        %v191 = vadd.s32 %v179, 96
        %v192 = vadd.s32 %v179, 104
        %v193 = vadd.s32 %v179, 112
        %v194 = vadd.s32 %v179, 120
        %v195 = vlaneseq
        %v196 = vshrl.u32 %v195, 7
        %v197 = vsub.s32 0, %v196
        %v198 = vrot.slane %v177, %v197
        %v199 = vlaneseq
        %v200 = vshrl.u32 %v199, 7
        %v201 = vsub.s32 4, %v200
        %v202 = vrot.slane %v177, %v201
        %v203 = vlaneseq
        %v204 = vshrl.u32 %v203, 7
        %v205 = vsub.s32 0, %v204
        %v206 = vrot.slane %v198, %v205
        %v207 = vlaneseq
        %v208 = vshrl.u32 %v207, 7
        %v209 = vsub.s32 0, %v208
        %v210 = vrot.slane %v202, %v209
        %vm211 = vcmp.eq.s32.totalorder %v179, %v206
        %vm212 = vcmp.eq.s32.totalorder %v179, %v210
        %vm213 = vcmp.eq.s32.totalorder %v180, %v206
        %vm214 = vcmp.eq.s32.totalorder %v180, %v210
        %vm215 = vcmp.eq.s32.totalorder %v181, %v206
        %vm216 = vcmp.eq.s32.totalorder %v181, %v210
        %vm217 = vcmp.eq.s32.totalorder %v182, %v206
        %vm218 = vcmp.eq.s32.totalorder %v182, %v210
        %vm219 = vcmp.eq.s32.totalorder %v183, %v206
        %vm220 = vcmp.eq.s32.totalorder %v183, %v210
        %vm221 = vcmp.eq.s32.totalorder %v184, %v206
        %vm222 = vcmp.eq.s32.totalorder %v184, %v210
        %vm223 = vcmp.eq.s32.totalorder %v185, %v206
        %vm224 = vcmp.eq.s32.totalorder %v185, %v210
        %vm225 = vcmp.eq.s32.totalorder %v186, %v206
        %vm226 = vcmp.eq.s32.totalorder %v186, %v210
        %vm227 = vcmp.eq.s32.totalorder %v187, %v206
        %vm228 = vcmp.eq.s32.totalorder %v187, %v210
        %vm229 = vcmp.eq.s32.totalorder %v188, %v206
        %vm230 = vcmp.eq.s32.totalorder %v188, %v210
        %vm231 = vcmp.eq.s32.totalorder %v189, %v206
        %vm232 = vcmp.eq.s32.totalorder %v189, %v210
        %vm233 = vcmp.eq.s32.totalorder %v190, %v206
        %vm234 = vcmp.eq.s32.totalorder %v190, %v210
        %vm235 = vcmp.eq.s32.totalorder %v191, %v206
        %vm236 = vcmp.eq.s32.totalorder %v191, %v210
        %vm237 = vcmp.eq.s32.totalorder %v192, %v206
        %vm238 = vcmp.eq.s32.totalorder %v192, %v210
        %vm239 = vcmp.eq.s32.totalorder %v193, %v206
        %vm240 = vcmp.eq.s32.totalorder %v193, %v210
        %vm241 = vcmp.eq.s32.totalorder %v194, %v206
        %vm242 = vcmp.eq.s32.totalorder %v194, %v210
        %v243 = vsel %vm211, 1, 0
        %v244 = vsel %vm212, 1, 0
        %v245 = vsel %vm213, 1, 0
        %v246 = vsel %vm214, 1, 0
        %v247 = vsel %vm215, 1, 0
        %v248 = vsel %vm216, 1, 0
        %v249 = vsel %vm217, 1, 0
        %v250 = vsel %vm218, 1, 0
        %v251 = vsel %vm219, 1, 0
        %v252 = vsel %vm220, 1, 0
        %v253 = vsel %vm221, 1, 0
        %v254 = vsel %vm222, 1, 0
        %v255 = vsel %vm223, 1, 0
        %v256 = vsel %vm224, 1, 0
        %v257 = vsel %vm225, 1, 0
        %v258 = vsel %vm226, 1, 0
        %v259 = vsel %vm227, 1, 0
        %v260 = vsel %vm228, 1, 0
        %v261 = vsel %vm229, 1, 0
        %v262 = vsel %vm230, 1, 0
        %v263 = vsel %vm231, 1, 0
        %v264 = vsel %vm232, 1, 0
        %v265 = vsel %vm233, 1, 0
        %v266 = vsel %vm234, 1, 0
        %v267 = vsel %vm235, 1, 0
        %v268 = vsel %vm236, 1, 0
        %v269 = vsel %vm237, 1, 0
        %v270 = vsel %vm238, 1, 0
        %v271 = vsel %vm239, 1, 0
        %v272 = vsel %vm240, 1, 0
        %v273 = vsel %vm241, 1, 0
        %v274 = vsel %vm242, 1, 0
        %v275 = vlaneseq
        %v276 = vshrl.u32 %v275, 7
        %v277 = vsub.s32 1, %v276
        %v278 = vrot.slane %v177, %v277
        %v279 = vlaneseq
        %v280 = vshrl.u32 %v279, 7
        %v281 = vsub.s32 5, %v280
        %v282 = vrot.slane %v177, %v281
        %v283 = vlaneseq
        %v284 = vshrl.u32 %v283, 7
        %v285 = vsub.s32 1, %v284
        %v286 = vrot.slane %v278, %v285
        %v287 = vlaneseq
        %v288 = vshrl.u32 %v287, 7
        %v289 = vsub.s32 1, %v288
        %v290 = vrot.slane %v282, %v289
        %vm291 = vcmp.eq.s32.totalorder %v179, %v286
        %vm292 = vcmp.eq.s32.totalorder %v179, %v290
        %vm293 = vcmp.eq.s32.totalorder %v180, %v286
        %vm294 = vcmp.eq.s32.totalorder %v180, %v290
        %vm295 = vcmp.eq.s32.totalorder %v181, %v286
        %vm296 = vcmp.eq.s32.totalorder %v181, %v290
        %vm297 = vcmp.eq.s32.totalorder %v182, %v286
        %vm298 = vcmp.eq.s32.totalorder %v182, %v290
        %vm299 = vcmp.eq.s32.totalorder %v183, %v286
        %vm300 = vcmp.eq.s32.totalorder %v183, %v290
        %vm301 = vcmp.eq.s32.totalorder %v184, %v286
        %vm302 = vcmp.eq.s32.totalorder %v184, %v290
        %vm303 = vcmp.eq.s32.totalorder %v185, %v286
        %vm304 = vcmp.eq.s32.totalorder %v185, %v290
        %vm305 = vcmp.eq.s32.totalorder %v186, %v286
        %vm306 = vcmp.eq.s32.totalorder %v186, %v290
        %vm307 = vcmp.eq.s32.totalorder %v187, %v286
        %vm308 = vcmp.eq.s32.totalorder %v187, %v290
        %vm309 = vcmp.eq.s32.totalorder %v188, %v286
        %vm310 = vcmp.eq.s32.totalorder %v188, %v290
        %vm311 = vcmp.eq.s32.totalorder %v189, %v286
        %vm312 = vcmp.eq.s32.totalorder %v189, %v290
        %vm313 = vcmp.eq.s32.totalorder %v190, %v286
        %vm314 = vcmp.eq.s32.totalorder %v190, %v290
        %vm315 = vcmp.eq.s32.totalorder %v191, %v286
        %vm316 = vcmp.eq.s32.totalorder %v191, %v290
        %vm317 = vcmp.eq.s32.totalorder %v192, %v286
        %vm318 = vcmp.eq.s32.totalorder %v192, %v290
        %vm319 = vcmp.eq.s32.totalorder %v193, %v286
        %vm320 = vcmp.eq.s32.totalorder %v193, %v290
        %vm321 = vcmp.eq.s32.totalorder %v194, %v286
        %vm322 = vcmp.eq.s32.totalorder %v194, %v290
        %v323 = vsel %vm291, 1, 0
        %v324 = vsel %vm292, 1, 0
        %v325 = vsel %vm293, 1, 0
        %v326 = vsel %vm294, 1, 0
        %v327 = vsel %vm295, 1, 0
        %v328 = vsel %vm296, 1, 0
        %v329 = vsel %vm297, 1, 0
        %v330 = vsel %vm298, 1, 0
        %v331 = vsel %vm299, 1, 0
        %v332 = vsel %vm300, 1, 0
        %v333 = vsel %vm301, 1, 0
        %v334 = vsel %vm302, 1, 0
        %v335 = vsel %vm303, 1, 0
        %v336 = vsel %vm304, 1, 0
        %v337 = vsel %vm305, 1, 0
        %v338 = vsel %vm306, 1, 0
        %v339 = vsel %vm307, 1, 0
        %v340 = vsel %vm308, 1, 0
        %v341 = vsel %vm309, 1, 0
        %v342 = vsel %vm310, 1, 0
        %v343 = vsel %vm311, 1, 0
        %v344 = vsel %vm312, 1, 0
        %v345 = vsel %vm313, 1, 0
        %v346 = vsel %vm314, 1, 0
        %v347 = vsel %vm315, 1, 0
        %v348 = vsel %vm316, 1, 0
        %v349 = vsel %vm317, 1, 0
        %v350 = vsel %vm318, 1, 0
        %v351 = vsel %vm319, 1, 0
        %v352 = vsel %vm320, 1, 0
        %v353 = vsel %vm321, 1, 0
        %v354 = vsel %vm322, 1, 0
        %v355 = vadd.s32 %v243, %v323
        %v356 = vadd.s32 %v244, %v324
        %v357 = vadd.s32 %v245, %v325
        %v358 = vadd.s32 %v246, %v326
        %v359 = vadd.s32 %v247, %v327
        %v360 = vadd.s32 %v248, %v328
        %v361 = vadd.s32 %v249, %v329
        %v362 = vadd.s32 %v250, %v330
        %v363 = vadd.s32 %v251, %v331
        %v364 = vadd.s32 %v252, %v332
        %v365 = vadd.s32 %v253, %v333
        %v366 = vadd.s32 %v254, %v334
        %v367 = vadd.s32 %v255, %v335
        %v368 = vadd.s32 %v256, %v336
        %v369 = vadd.s32 %v257, %v337
        %v370 = vadd.s32 %v258, %v338
        %v371 = vadd.s32 %v259, %v339
        %v372 = vadd.s32 %v260, %v340
        %v373 = vadd.s32 %v261, %v341
        %v374 = vadd.s32 %v262, %v342
        %v375 = vadd.s32 %v263, %v343
        %v376 = vadd.s32 %v264, %v344
        %v377 = vadd.s32 %v265, %v345
        %v378 = vadd.s32 %v266, %v346
        %v379 = vadd.s32 %v267, %v347
        %v380 = vadd.s32 %v268, %v348
        %v381 = vadd.s32 %v269, %v349
        %v382 = vadd.s32 %v270, %v350
        %v383 = vadd.s32 %v271, %v351
        %v384 = vadd.s32 %v272, %v352
        %v385 = vadd.s32 %v273, %v353
        %v386 = vadd.s32 %v274, %v354
        %v387 = vlaneseq
        %v388 = vshrl.u32 %v387, 7
        %v389 = vsub.s32 2, %v388
        %v390 = vrot.slane %v177, %v389
        %v391 = vlaneseq
        %v392 = vshrl.u32 %v391, 7
        %v393 = vsub.s32 6, %v392
        %v394 = vrot.slane %v177, %v393
        %v395 = vlaneseq
        %v396 = vshrl.u32 %v395, 7
        %v397 = vsub.s32 2, %v396
        %v398 = vrot.slane %v390, %v397
        %v399 = vlaneseq
        %v400 = vshrl.u32 %v399, 7
        %v401 = vsub.s32 2, %v400
        %v402 = vrot.slane %v394, %v401
        %vm403 = vcmp.eq.s32.totalorder %v179, %v398
        %vm404 = vcmp.eq.s32.totalorder %v179, %v402
        %vm405 = vcmp.eq.s32.totalorder %v180, %v398
        %vm406 = vcmp.eq.s32.totalorder %v180, %v402
        %vm407 = vcmp.eq.s32.totalorder %v181, %v398
        %vm408 = vcmp.eq.s32.totalorder %v181, %v402
        %vm409 = vcmp.eq.s32.totalorder %v182, %v398
        %vm410 = vcmp.eq.s32.totalorder %v182, %v402
        %vm411 = vcmp.eq.s32.totalorder %v183, %v398
        %vm412 = vcmp.eq.s32.totalorder %v183, %v402
        %vm413 = vcmp.eq.s32.totalorder %v184, %v398
        %vm414 = vcmp.eq.s32.totalorder %v184, %v402
        %vm415 = vcmp.eq.s32.totalorder %v185, %v398
        %vm416 = vcmp.eq.s32.totalorder %v185, %v402
        %vm417 = vcmp.eq.s32.totalorder %v186, %v398
        %vm418 = vcmp.eq.s32.totalorder %v186, %v402
        %vm419 = vcmp.eq.s32.totalorder %v187, %v398
        %vm420 = vcmp.eq.s32.totalorder %v187, %v402
        %vm421 = vcmp.eq.s32.totalorder %v188, %v398
        %vm422 = vcmp.eq.s32.totalorder %v188, %v402
        %vm423 = vcmp.eq.s32.totalorder %v189, %v398
        %vm424 = vcmp.eq.s32.totalorder %v189, %v402
        %vm425 = vcmp.eq.s32.totalorder %v190, %v398
        %vm426 = vcmp.eq.s32.totalorder %v190, %v402
        %vm427 = vcmp.eq.s32.totalorder %v191, %v398
        %vm428 = vcmp.eq.s32.totalorder %v191, %v402
        %vm429 = vcmp.eq.s32.totalorder %v192, %v398
        %vm430 = vcmp.eq.s32.totalorder %v192, %v402
        %vm431 = vcmp.eq.s32.totalorder %v193, %v398
        %vm432 = vcmp.eq.s32.totalorder %v193, %v402
        %vm433 = vcmp.eq.s32.totalorder %v194, %v398
        %vm434 = vcmp.eq.s32.totalorder %v194, %v402
        %v435 = vsel %vm403, 1, 0
        %v436 = vsel %vm404, 1, 0
        %v437 = vsel %vm405, 1, 0
        %v438 = vsel %vm406, 1, 0
        %v439 = vsel %vm407, 1, 0
        %v440 = vsel %vm408, 1, 0
        %v441 = vsel %vm409, 1, 0
        %v442 = vsel %vm410, 1, 0
        %v443 = vsel %vm411, 1, 0
        %v444 = vsel %vm412, 1, 0
        %v445 = vsel %vm413, 1, 0
        %v446 = vsel %vm414, 1, 0
        %v447 = vsel %vm415, 1, 0
        %v448 = vsel %vm416, 1, 0
        %v449 = vsel %vm417, 1, 0
        %v450 = vsel %vm418, 1, 0
        %v451 = vsel %vm419, 1, 0
        %v452 = vsel %vm420, 1, 0
        %v453 = vsel %vm421, 1, 0
        %v454 = vsel %vm422, 1, 0
        %v455 = vsel %vm423, 1, 0
        %v456 = vsel %vm424, 1, 0
        %v457 = vsel %vm425, 1, 0
        %v458 = vsel %vm426, 1, 0
        %v459 = vsel %vm427, 1, 0
        %v460 = vsel %vm428, 1, 0
        %v461 = vsel %vm429, 1, 0
        %v462 = vsel %vm430, 1, 0
        %v463 = vsel %vm431, 1, 0
        %v464 = vsel %vm432, 1, 0
        %v465 = vsel %vm433, 1, 0
        %v466 = vsel %vm434, 1, 0
        %v467 = vadd.s32 %v355, %v435
        %v468 = vadd.s32 %v356, %v436
        %v469 = vadd.s32 %v357, %v437
        %v470 = vadd.s32 %v358, %v438
        %v471 = vadd.s32 %v359, %v439
        %v472 = vadd.s32 %v360, %v440
        %v473 = vadd.s32 %v361, %v441
        %v474 = vadd.s32 %v362, %v442
        %v475 = vadd.s32 %v363, %v443
        %v476 = vadd.s32 %v364, %v444
        %v477 = vadd.s32 %v365, %v445
        %v478 = vadd.s32 %v366, %v446
        %v479 = vadd.s32 %v367, %v447
        %v480 = vadd.s32 %v368, %v448
        %v481 = vadd.s32 %v369, %v449
        %v482 = vadd.s32 %v370, %v450
        %v483 = vadd.s32 %v371, %v451
        %v484 = vadd.s32 %v372, %v452
        %v485 = vadd.s32 %v373, %v453
        %v486 = vadd.s32 %v374, %v454
        %v487 = vadd.s32 %v375, %v455
        %v488 = vadd.s32 %v376, %v456
        %v489 = vadd.s32 %v377, %v457
        %v490 = vadd.s32 %v378, %v458
        %v491 = vadd.s32 %v379, %v459
        %v492 = vadd.s32 %v380, %v460
        %v493 = vadd.s32 %v381, %v461
        %v494 = vadd.s32 %v382, %v462
        %v495 = vadd.s32 %v383, %v463
        %v496 = vadd.s32 %v384, %v464
        %v497 = vadd.s32 %v385, %v465
        %v498 = vadd.s32 %v386, %v466
        %v499 = vlaneseq
        %v500 = vshrl.u32 %v499, 7
        %v501 = vsub.s32 3, %v500
        %v502 = vrot.slane %v177, %v501
        %v503 = vlaneseq
        %v504 = vshrl.u32 %v503, 7
        %v505 = vsub.s32 7, %v504
        %v506 = vrot.slane %v177, %v505
        %v507 = vlaneseq
        %v508 = vshrl.u32 %v507, 7
        %v509 = vsub.s32 3, %v508
        %v510 = vrot.slane %v502, %v509
        %v511 = vlaneseq
        %v512 = vshrl.u32 %v511, 7
        %v513 = vsub.s32 3, %v512
        %v514 = vrot.slane %v506, %v513
        %vm515 = vcmp.eq.s32.totalorder %v179, %v510
        %vm516 = vcmp.eq.s32.totalorder %v179, %v514
        %vm517 = vcmp.eq.s32.totalorder %v180, %v510
        %vm518 = vcmp.eq.s32.totalorder %v180, %v514
        %vm519 = vcmp.eq.s32.totalorder %v181, %v510
        %vm520 = vcmp.eq.s32.totalorder %v181, %v514
        %vm521 = vcmp.eq.s32.totalorder %v182, %v510
        %vm522 = vcmp.eq.s32.totalorder %v182, %v514
        %vm523 = vcmp.eq.s32.totalorder %v183, %v510
        %vm524 = vcmp.eq.s32.totalorder %v183, %v514
        %vm525 = vcmp.eq.s32.totalorder %v184, %v510
        %vm526 = vcmp.eq.s32.totalorder %v184, %v514
        %vm527 = vcmp.eq.s32.totalorder %v185, %v510
        %vm528 = vcmp.eq.s32.totalorder %v185, %v514
        %vm529 = vcmp.eq.s32.totalorder %v186, %v510
        %vm530 = vcmp.eq.s32.totalorder %v186, %v514
        %vm531 = vcmp.eq.s32.totalorder %v187, %v510
        %vm532 = vcmp.eq.s32.totalorder %v187, %v514
        %vm533 = vcmp.eq.s32.totalorder %v188, %v510
        %vm534 = vcmp.eq.s32.totalorder %v188, %v514
        %vm535 = vcmp.eq.s32.totalorder %v189, %v510
        %vm536 = vcmp.eq.s32.totalorder %v189, %v514
        %vm537 = vcmp.eq.s32.totalorder %v190, %v510
        %vm538 = vcmp.eq.s32.totalorder %v190, %v514
        %vm539 = vcmp.eq.s32.totalorder %v191, %v510
        %vm540 = vcmp.eq.s32.totalorder %v191, %v514
        %vm541 = vcmp.eq.s32.totalorder %v192, %v510
        %vm542 = vcmp.eq.s32.totalorder %v192, %v514
        %vm543 = vcmp.eq.s32.totalorder %v193, %v510
        %vm544 = vcmp.eq.s32.totalorder %v193, %v514
        %vm545 = vcmp.eq.s32.totalorder %v194, %v510
        %vm546 = vcmp.eq.s32.totalorder %v194, %v514
        %v547 = vsel %vm515, 1, 0
        %v548 = vsel %vm516, 1, 0
        %v549 = vsel %vm517, 1, 0
        %v550 = vsel %vm518, 1, 0
        %v551 = vsel %vm519, 1, 0
        %v552 = vsel %vm520, 1, 0
        %v553 = vsel %vm521, 1, 0
        %v554 = vsel %vm522, 1, 0
        %v555 = vsel %vm523, 1, 0
        %v556 = vsel %vm524, 1, 0
        %v557 = vsel %vm525, 1, 0
        %v558 = vsel %vm526, 1, 0
        %v559 = vsel %vm527, 1, 0
        %v560 = vsel %vm528, 1, 0
        %v561 = vsel %vm529, 1, 0
        %v562 = vsel %vm530, 1, 0
        %v563 = vsel %vm531, 1, 0
        %v564 = vsel %vm532, 1, 0
        %v565 = vsel %vm533, 1, 0
        %v566 = vsel %vm534, 1, 0
        %v567 = vsel %vm535, 1, 0
        %v568 = vsel %vm536, 1, 0
        %v569 = vsel %vm537, 1, 0
        %v570 = vsel %vm538, 1, 0
        %v571 = vsel %vm539, 1, 0
        %v572 = vsel %vm540, 1, 0
        %v573 = vsel %vm541, 1, 0
        %v574 = vsel %vm542, 1, 0
        %v575 = vsel %vm543, 1, 0
        %v576 = vsel %vm544, 1, 0
        %v577 = vsel %vm545, 1, 0
        %v578 = vsel %vm546, 1, 0
        %v579 = vadd.s32 %v467, %v547
        %v580 = vadd.s32 %v468, %v548
        %v581 = vadd.s32 %v469, %v549
        %v582 = vadd.s32 %v470, %v550
        %v583 = vadd.s32 %v471, %v551
        %v584 = vadd.s32 %v472, %v552
        %v585 = vadd.s32 %v473, %v553
        %v586 = vadd.s32 %v474, %v554
        %v587 = vadd.s32 %v475, %v555
        %v588 = vadd.s32 %v476, %v556
        %v589 = vadd.s32 %v477, %v557
        %v590 = vadd.s32 %v478, %v558
        %v591 = vadd.s32 %v479, %v559
        %v592 = vadd.s32 %v480, %v560
        %v593 = vadd.s32 %v481, %v561
        %v594 = vadd.s32 %v482, %v562
        %v595 = vadd.s32 %v483, %v563
        %v596 = vadd.s32 %v484, %v564
        %v597 = vadd.s32 %v485, %v565
        %v598 = vadd.s32 %v486, %v566
        %v599 = vadd.s32 %v487, %v567
        %v600 = vadd.s32 %v488, %v568
        %v601 = vadd.s32 %v489, %v569
        %v602 = vadd.s32 %v490, %v570
        %v603 = vadd.s32 %v491, %v571
        %v604 = vadd.s32 %v492, %v572
        %v605 = vadd.s32 %v493, %v573
        %v606 = vadd.s32 %v494, %v574
        %v607 = vadd.s32 %v495, %v575
        %v608 = vadd.s32 %v496, %v576
        %v609 = vadd.s32 %v497, %v577
        %v610 = vadd.s32 %v498, %v578
        %v611 = vcvt.s32.f32 %v579
        %v612 = vcvt.s32.f32 %v580
        %v613 = vcvt.s32.f32 %v581
        %v614 = vcvt.s32.f32 %v582
        %v615 = vcvt.s32.f32 %v583
        %v616 = vcvt.s32.f32 %v584
        %v617 = vcvt.s32.f32 %v585
        %v618 = vcvt.s32.f32 %v586
        %v619 = vcvt.s32.f32 %v587
        %v620 = vcvt.s32.f32 %v588
        %v621 = vcvt.s32.f32 %v589
        %v622 = vcvt.s32.f32 %v590
        %v623 = vcvt.s32.f32 %v591
        %v624 = vcvt.s32.f32 %v592
        %v625 = vcvt.s32.f32 %v593
        %v626 = vcvt.s32.f32 %v594
        %v627 = vcvt.s32.f32 %v595
        %v628 = vcvt.s32.f32 %v596
        %v629 = vcvt.s32.f32 %v597
        %v630 = vcvt.s32.f32 %v598
        %v631 = vcvt.s32.f32 %v599
        %v632 = vcvt.s32.f32 %v600
        %v633 = vcvt.s32.f32 %v601
        %v634 = vcvt.s32.f32 %v602
        %v635 = vcvt.s32.f32 %v603
        %v636 = vcvt.s32.f32 %v604
        %v637 = vcvt.s32.f32 %v605
        %v638 = vcvt.s32.f32 %v606
        %v639 = vcvt.s32.f32 %v607
        %v640 = vcvt.s32.f32 %v608
        %v641 = vcvt.s32.f32 %v609
        %v642 = vcvt.s32.f32 %v610
        %v643 = vld [vmem:[#allocation5] sm:$0xff]
        %v644 = vld [vmem:[#allocation5 + $0x8] sm:$0xff]
        %v645 = vld [vmem:[#allocation5 + $0x10] sm:$0xff]
        %v646 = vld [vmem:[#allocation5 + $0x18] sm:$0xff]
        %v647 = vld [vmem:[#allocation5 + $0x20] sm:$0xff]
        %v648 = vld [vmem:[#allocation5 + $0x28] sm:$0xff]
        %v649 = vld [vmem:[#allocation5 + $0x30] sm:$0xff]
        %v650 = vld [vmem:[#allocation5 + $0x38] sm:$0xff]
        %v651 = vld [vmem:[#allocation5 + $0x40] sm:$0xff]
        %v652 = vld [vmem:[#allocation5 + $0x48] sm:$0xff]
        %v653 = vld [vmem:[#allocation5 + $0x50] sm:$0xff]
        %v654 = vld [vmem:[#allocation5 + $0x58] sm:$0xff]
        %v655 = vld [vmem:[#allocation5 + $0x60] sm:$0xff]
        %v656 = vld [vmem:[#allocation5 + $0x68] sm:$0xff]
        %v657 = vld [vmem:[#allocation5 + $0x70] sm:$0xff]
        %v658 = vld [vmem:[#allocation5 + $0x78] sm:$0xff]
        %659 = vmatprep.subr.mxu0 %v612
        %660 = vmatpush1.msra.mxu0 %v611
        %661 = vmatprep.subr.mxu0 %v614
        %662 = vmatpush1.msra.mxu0 %v613
        %663 = vmatprep.subr.mxu0 %v616
        %664 = vmatpush1.msra.mxu0 %v615
        %665 = vmatprep.subr.mxu0 %v618
        %666 = vmatpush1.msra.mxu0 %v617
        %667 = vmatprep.subr.mxu0 %v620
        %668 = vmatpush1.msra.mxu0 %v619
        %669 = vmatprep.subr.mxu0 %v622
        %670 = vmatpush1.msra.mxu0 %v621
        %671 = vmatprep.subr.mxu0 %v624
        %672 = vmatpush1.msra.mxu0 %v623
        %673 = vmatprep.subr.mxu0 %v626
        %674 = vmatpush1.msra.mxu0 %v625
        %675 = vmatprep.subr.mxu0 %v628
        %676 = vmatpush1.msra.mxu0 %v627
        %677 = vmatprep.subr.mxu0 %v630
        %678 = vmatpush1.msra.mxu0 %v629
        %679 = vmatprep.subr.mxu0 %v632
        %680 = vmatpush1.msra.mxu0 %v631
        %681 = vmatprep.subr.mxu0 %v634
        %682 = vmatpush1.msra.mxu0 %v633
        %683 = vmatprep.subr.mxu0 %v636
        %684 = vmatpush1.msra.mxu0 %v635
        %685 = vmatprep.subr.mxu0 %v638
        %686 = vmatpush1.msra.mxu0 %v637
        %687 = vmatprep.subr.mxu0 %v640
        %688 = vmatpush1.msra.mxu0 %v639
        %689 = vmatprep.subr.mxu0 %v642
        %690 = vmatpush1.msra.mxu0 %v641
        %691 = vmatprep.subr.mxu0 0.0
        %692 = vmatpush1.msra.mxu0 0.0
        %693 = vmatprep.subr.mxu0 0.0
        %694 = vmatpush1.msra.mxu0 0.0
        %695 = vmatprep.subr.mxu0 0.0
        %696 = vmatpush1.msra.mxu0 0.0
        %697 = vmatprep.subr.mxu0 0.0
        %698 = vmatpush1.msra.mxu0 0.0
        %699 = vmatprep.subr.mxu0 0.0
        %700 = vmatpush1.msra.mxu0 0.0
        %701 = vmatprep.subr.mxu0 0.0
        %702 = vmatpush1.msra.mxu0 0.0
        %703 = vmatprep.subr.mxu0 0.0
        %704 = vmatpush1.msra.mxu0 0.0
        %705 = vmatprep.subr.mxu0 0.0
        %706 = vmatpush1.msra.mxu0 0.0
        %707 = vmatprep.subr.mxu0 0.0
        %708 = vmatpush1.msra.mxu0 0.0
        %709 = vmatprep.subr.mxu0 0.0
        %710 = vmatpush1.msra.mxu0 0.0
        %711 = vmatprep.subr.mxu0 0.0
        %712 = vmatpush1.msra.mxu0 0.0
        %713 = vmatprep.subr.mxu0 0.0
        %714 = vmatpush1.msra.mxu0 0.0
        %715 = vmatprep.subr.mxu0 0.0
        %716 = vmatpush1.msra.mxu0 0.0
        %717 = vmatprep.subr.mxu0 0.0
        %718 = vmatpush1.msra.mxu0 0.0
        %719 = vmatprep.subr.mxu0 0.0
        %720 = vmatpush1.msra.mxu0 0.0
        %721 = vmatprep.subr.mxu0 0.0
        %722 = vmatpush1.msra.mxu0 0.0
        %723 = vmatprep.mubr.f32.mxu0 0.0
        %724 = vmatmul.mubr.f32.gmra.mrb[0].mxu0 %v643
        %v725 = vpop.f32.mrb[0].mxu0
        %v726 = vadd.f32 0.0, %v725
        %v727 = vpop.f32.mrb[0].mxu0
        %v728 = vadd.f32 0.0, %v727
        %729 = vmatprep.mubr.f32.mxu0 0.0
        %730 = vmatmul.mubr.f32.gmra.mrb[0].mxu0 %v644
        %v731 = vpop.f32.mrb[0].mxu0
        %v732 = vadd.f32 0.0, %v731
        %v733 = vpop.f32.mrb[0].mxu0
        %v734 = vadd.f32 0.0, %v733
        %735 = vmatprep.mubr.f32.mxu0 0.0
        %736 = vmatmul.mubr.f32.gmra.mrb[0].mxu0 %v645
        %v737 = vpop.f32.mrb[0].mxu0
        %v738 = vadd.f32 0.0, %v737
        %v739 = vpop.f32.mrb[0].mxu0
        %v740 = vadd.f32 0.0, %v739
        %741 = vmatprep.mubr.f32.mxu0 0.0
        %742 = vmatmul.mubr.f32.gmra.mrb[0].mxu0 %v646
        %v743 = vpop.f32.mrb[0].mxu0
        %v744 = vadd.f32 0.0, %v743
        %v745 = vpop.f32.mrb[0].mxu0
        %v746 = vadd.f32 0.0, %v745
        %747 = vmatprep.mubr.f32.mxu0 0.0
        %748 = vmatmul.mubr.f32.gmra.mrb[0].mxu0 %v647
        %v749 = vpop.f32.mrb[0].mxu0
        %v750 = vadd.f32 0.0, %v749
        %v751 = vpop.f32.mrb[0].mxu0
        %v752 = vadd.f32 0.0, %v751
        %753 = vmatprep.mubr.f32.mxu0 0.0
        %754 = vmatmul.mubr.f32.gmra.mrb[0].mxu0 %v648
        %v755 = vpop.f32.mrb[0].mxu0
        %v756 = vadd.f32 0.0, %v755
        %v757 = vpop.f32.mrb[0].mxu0
        %v758 = vadd.f32 0.0, %v757
        %759 = vmatprep.mubr.f32.mxu0 0.0
        %760 = vmatmul.mubr.f32.gmra.mrb[0].mxu0 %v649
        %v761 = vpop.f32.mrb[0].mxu0
        %v762 = vadd.f32 0.0, %v761
        %v763 = vpop.f32.mrb[0].mxu0
        %v764 = vadd.f32 0.0, %v763
        %765 = vmatprep.mubr.f32.mxu0 0.0
        %766 = vmatmul.mubr.f32.gmra.mrb[0].mxu0 %v650
        %v767 = vpop.f32.mrb[0].mxu0
        %v768 = vadd.f32 0.0, %v767
        %v769 = vpop.f32.mrb[0].mxu0
        %v770 = vadd.f32 0.0, %v769
        %771 = vmatprep.mubr.f32.mxu0 0.0
        %772 = vmatmul.mubr.f32.gmra.mrb[0].mxu0 %v651
        %v773 = vpop.f32.mrb[0].mxu0
        %v774 = vadd.f32 0.0, %v773
        %v775 = vpop.f32.mrb[0].mxu0
        %v776 = vadd.f32 0.0, %v775
        %777 = vmatprep.mubr.f32.mxu0 0.0
        %778 = vmatmul.mubr.f32.gmra.mrb[0].mxu0 %v652
        %v779 = vpop.f32.mrb[0].mxu0
        %v780 = vadd.f32 0.0, %v779
        %v781 = vpop.f32.mrb[0].mxu0
        %v782 = vadd.f32 0.0, %v781
        %783 = vmatprep.mubr.f32.mxu0 0.0
        %784 = vmatmul.mubr.f32.gmra.mrb[0].mxu0 %v653
        %v785 = vpop.f32.mrb[0].mxu0
        %v786 = vadd.f32 0.0, %v785
        %v787 = vpop.f32.mrb[0].mxu0
        %v788 = vadd.f32 0.0, %v787
        %789 = vmatprep.mubr.f32.mxu0 0.0
        %790 = vmatmul.mubr.f32.gmra.mrb[0].mxu0 %v654
        %v791 = vpop.f32.mrb[0].mxu0
        %v792 = vadd.f32 0.0, %v791
        %v793 = vpop.f32.mrb[0].mxu0
        %v794 = vadd.f32 0.0, %v793
        %795 = vmatprep.mubr.f32.mxu0 0.0
        %796 = vmatmul.mubr.f32.gmra.mrb[0].mxu0 %v655
        %v797 = vpop.f32.mrb[0].mxu0
        %v798 = vadd.f32 0.0, %v797
        %v799 = vpop.f32.mrb[0].mxu0
        %v800 = vadd.f32 0.0, %v799
        %801 = vmatprep.mubr.f32.mxu0 0.0
        %802 = vmatmul.mubr.f32.gmra.mrb[0].mxu0 %v656
        %v803 = vpop.f32.mrb[0].mxu0
        %v804 = vadd.f32 0.0, %v803
        %v805 = vpop.f32.mrb[0].mxu0
        %v806 = vadd.f32 0.0, %v805
        %807 = vmatprep.mubr.f32.mxu0 0.0
        %808 = vmatmul.mubr.f32.gmra.mrb[0].mxu0 %v657
        %v809 = vpop.f32.mrb[0].mxu0
        %v810 = vadd.f32 0.0, %v809
        %v811 = vpop.f32.mrb[0].mxu0
        %v812 = vadd.f32 0.0, %v811
        %813 = vmatprep.mubr.f32.mxu0 0.0
        %814 = vmatmul.mubr.f32.gmra.mrb[0].mxu0 %v658
        %v815 = vpop.f32.mrb[0].mxu0
        %v816 = vadd.f32 0.0, %v815
        %v817 = vpop.f32.mrb[0].mxu0
        %v818 = vadd.f32 0.0, %v817
        %819 = vdwg.mxu0
        %v820 = vmul.f32 %v726, %v726
        %v821 = vmul.f32 %v728, %v728
        %v822 = vmul.f32 %v732, %v732
        %v823 = vmul.f32 %v734, %v734
        %v824 = vmul.f32 %v738, %v738
        %v825 = vmul.f32 %v740, %v740
        %v826 = vmul.f32 %v744, %v744
        %v827 = vmul.f32 %v746, %v746
        %v828 = vmul.f32 %v750, %v750
        %v829 = vmul.f32 %v752, %v752
        %v830 = vmul.f32 %v756, %v756
        %v831 = vmul.f32 %v758, %v758
        %v832 = vmul.f32 %v762, %v762
        %v833 = vmul.f32 %v764, %v764
        %v834 = vmul.f32 %v768, %v768
        %v835 = vmul.f32 %v770, %v770
        %v836 = vmul.f32 %v774, %v774
        %v837 = vmul.f32 %v776, %v776
        %v838 = vmul.f32 %v780, %v780
        %v839 = vmul.f32 %v782, %v782
        %v840 = vmul.f32 %v786, %v786
        %v841 = vmul.f32 %v788, %v788
        %v842 = vmul.f32 %v792, %v792
        %v843 = vmul.f32 %v794, %v794
        %v844 = vmul.f32 %v798, %v798
        %v845 = vmul.f32 %v800, %v800
        %v846 = vmul.f32 %v804, %v804
        %v847 = vmul.f32 %v806, %v806
        %v848 = vmul.f32 %v810, %v810
        %v849 = vmul.f32 %v812, %v812
        %v850 = vmul.f32 %v816, %v816
        %v851 = vmul.f32 %v818, %v818
        %v852 = vadd.f32 %v820, %v822
        %v853 = vadd.f32 %v852, %v824
        %v854 = vadd.f32 %v853, %v826
        %v855 = vadd.f32 %v854, %v828
        %v856 = vadd.f32 %v855, %v830
        %v857 = vadd.f32 %v856, %v832
        %v858 = vadd.f32 %v857, %v834
        %v859 = vadd.f32 %v858, %v836
        %v860 = vadd.f32 %v859, %v838
        %v861 = vadd.f32 %v860, %v840
        %v862 = vadd.f32 %v861, %v842
        %v863 = vadd.f32 %v862, %v844
        %v864 = vadd.f32 %v863, %v846
        %v865 = vadd.f32 %v864, %v848
        %v866 = vadd.f32 %v865, %v850
        %v867 = vrot.slane %v866, 4
        %v868 = vadd.f32 %v866, %v867
        %v869 = vrot.slane %v868, 2
        %v870 = vadd.f32 %v868, %v869
        %v871 = vrot.slane %v870, 1
        %v872 = vadd.f32 %v870, %v871
        %v873 = vadd.f32 %v821, %v823
        %v874 = vadd.f32 %v873, %v825
        %v875 = vadd.f32 %v874, %v827
        %v876 = vadd.f32 %v875, %v829
        %v877 = vadd.f32 %v876, %v831
        %v878 = vadd.f32 %v877, %v833
        %v879 = vadd.f32 %v878, %v835
        %v880 = vadd.f32 %v879, %v837
        %v881 = vadd.f32 %v880, %v839
        %v882 = vadd.f32 %v881, %v841
        %v883 = vadd.f32 %v882, %v843
        %v884 = vadd.f32 %v883, %v845
        %v885 = vadd.f32 %v884, %v847
        %v886 = vadd.f32 %v885, %v849
        %v887 = vadd.f32 %v886, %v851
        %v888 = vrot.slane %v887, 4
        %v889 = vadd.f32 %v887, %v888
        %v890 = vrot.slane %v889, 2
        %v891 = vadd.f32 %v889, %v890
        %v892 = vrot.slane %v891, 1
        %v893 = vadd.f32 %v891, %v892
        %v894 = vsub.f32 %v872, %v850
        %v895 = vsub.f32 %v893, %v851
        %v896 = vsub.f32 %v894, %v816
        %v897 = vsub.f32 %v895, %v818
        %v898 = vmul.f32 %v896, 0.5
        %v899 = vmul.f32 %v897, 0.5
        %v902 = vcombine.high %v898, %v899
        %v904 = vunpack.c.l.s4 1966171168
        %v905 = vunpack.c.0.s8 %v904
        %v906 = vlaneseq
        %v907 = vshrl.u32 %v906, 7
        %v908 = vsub.s32 %v905, %v907
        %v909 = vrot.slane %v902, %v908
        %v910 = vcombine.high %v909, %v909
        %v912 = vunpack.c.l.s4 1966171168
        %v913 = vunpack.c.0.s8 %v912
        %v914 = vlaneseq
        %v915 = vshrl.u32 %v914, 7
        %v916 = vsub.s32 %v913, %v915
        %v917 = vrot.slane %v910, %v916
        %v918 = vcombine.high %v917, %v917
        %v920 = vlaneseq
        %vm921 = vcmp.ge.s32.totalorder %v920, 0
        %vm922 = vcmp.lt.s32.totalorder %v920, 256
        %vm923 = vmand %vm921, %vm922
        %924 = vst.msk [vmem:[%s174] sm:$0x3] %vm923, %v918
        %s925 = sand.u32 %s75, 1
        %s926 = scalar_lea.sflag [#allocation4], %s925
        %s927 = sand.u32 %s75, 1
        %s928 = smul.addr %s927, 2
        %s929 = scalar_lea.vmem [#allocation7], %s928
        // Predicated region
        $region37: #{tpu_custom_call.1} parent=27 // pred_check
          %p930 = pneg %p85
        $region38: #{tpu_custom_call.1} parent=27 // pred_check_branch
          %932 = sbr.rel (%p930) target = $region40
        $region39: #{tpu_custom_call.1} parent=27 // pred_region
          %s933 = smul.u32 2, %s20
          %s935 = ssub.s32 32, 32
          %936 = vsyncadd %s926, %s935
          %s937 = smul.addr %s933, 16
          %s938 = scalar_lea.hbm %s2, %s937
          %s940 = sshll.u32 %s929, 4
          %s941 = int_to_ptr.vmem [resolvable:$true] %s940
          %943 = dma.vmem_to_hbm [thread:$0]  %s941, 32, %s938, %s926
        $region40: #{tpu_custom_call.1} parent=27 // pred_fallthru
          _
      $region28: #{tpu_custom_call.1} parent=5 // pred_fallthru
        _
      %p944 = scmp.le.s32.totalorder 2, %s15
      // Predicated region
      $region41: #{tpu_custom_call.1} parent=5 // pred_check
        %p945 = pneg %p944
      $region42: #{tpu_custom_call.1} parent=5 // pred_check_branch
        %947 = sbr.rel (%p945) target = $region44
      $region43: #{tpu_custom_call.1} parent=5 // pred_region
        %s948 = ssub.s32 %s15, 2
        // Predicated region
        $region45: #{tpu_custom_call.1} parent=43 // pred_check
          %p949 = pneg %p91
        $region46: #{tpu_custom_call.1} parent=43 // pred_check_branch
          %951 = sbr.rel (%p949) target = $region48
        $region47: #{tpu_custom_call.1} parent=43 // pred_region
          %s952 = sand.u32 %s76, 1
          %s953 = scalar_lea.sflag [#allocation4], %s952
          %s954 = sand.u32 %s76, 1
          %s955 = smul.addr %s954, 2
          %s956 = scalar_lea.vmem [#allocation7], %s955
          %957 = dma.done %s953, 32
        $region48: #{tpu_custom_call.1} parent=43 // pred_fallthru
          _
      $region44: #{tpu_custom_call.1} parent=5 // pred_fallthru
        _
    $region6: #{tpu_custom_call.1} parent=1 // loop_footer
      %s19 = sadd.s32 1, %s15
    $region7: #{tpu_custom_call.1} parent=1 // loop_footer_branch
      %14 = sbr.rel target = $region3
    $region8: #{tpu_custom_call.1} parent=1 // loop_exit
      _
    %958 = vsyncpa [#allocation3], 1
    %s959 = scalar_lea.sflag [#allocation3], 1
    %960 = vsyncpa %s959, 1
    %961 = vsyncpa [#allocation6], 1
    %962 = vsyncpa [#allocation4], 1
    %s963 = scalar_lea.sflag [#allocation4], 1
    %964 = vsyncpa %s963, 1

// kernel: tpu_custom_call.1
$region0: #{tpu_custom_call.1}
  #allocation0 [shape = 'u32[]', space=smem, size = 0x4, offset = 0x4, fixed_abs, tag = 'smem constant byte address 0x4 - core index']
  #allocation1 [shape = 'u32[144,128]{1,0:T(1,128)}', space=vmem, size = 0x12000, scoped, tag = 'internal scratch']
  %s0 = inlined_call_operand.hbm [shape: s32[4,512], index: 0, kind: input, shape index: {}]
  %s1 = inlined_call_operand.hbm [shape: f32[128,128], index: 1, kind: input, shape index: {}]
  %s2 = inlined_call_operand.hbm [shape: f32[1,512], index: 2, kind: output, shape index: {}]
  %s3 = sld [smem:[#allocation0]]
  $region49: #{tpu_custom_call.1} parent=0
    _
  %s5 = ssub.s32 1, %s3
  %s6 = scalar_select 0, %s5, %s3
  $region1: #{tpu_custom_call.1} parent=0
    #allocation2 [shape = 'u8[8192]{0}', space=vmem, size = 0x2000, scoped, tag = 'input window, operand 0']
    #allocation3 [shape = 's32[2]{0}', space=sflag, size = 0x8, scoped, tag = 'scoped memory for tpu_custom_call.1']
    #allocation4 [shape = 's32[2]{0}', space=sflag, size = 0x8, scoped, tag = 'scoped memory for tpu_custom_call.1']
    #allocation5 [shape = 'u8[65536]{0}', space=vmem, size = 0x10000, scoped, tag = 'input window, operand 1, single buffered']
    #allocation6 [shape = 's32[1]{0}', space=sflag, size = 0x4, scoped, tag = 'scoped memory for tpu_custom_call.1']
    #allocation7 [shape = 'u8[2048]{0}', space=vmem, size = 0x800, scoped, tag = 'output window, operand 0']
    %7 = vsyncpa [#allocation3], 0
    %s8 = scalar_lea.sflag [#allocation3], 1
    %9 = vsyncpa %s8, 0
    %10 = vsyncpa [#allocation6], 0
    %11 = vsyncpa [#allocation4], 0
    %s12 = scalar_lea.sflag [#allocation4], 1
    %13 = vsyncpa %s12, 0
    loop: start=0, step=1, limit=4
    $region2: #{tpu_custom_call.1} parent=1 // loop_pre_header
      _
    $region3: #{tpu_custom_call.1} parent=1 // loop_header
      %s15 = sphi 0, %s19
      %p16 = scmp.ge.s32.totalorder %s15, 4
      %s25 = sphi 0, %s27
      %s28 = sphi 0, %s25
      %s29 = sphi 0, %s28
      %s45 = sphi 0, %s29
      %s49 = sphi 0, %s49
      %s51 = sphi 0, %s49
      %s52 = sphi 0, %s51
      %s66 = sphi 0, %s52
      %s72 = sphi 0, %s74
      %s75 = sphi 0, %s72
      %s76 = sphi 0, %s75
      %s92 = sphi 0, %s76
    $region4: #{tpu_custom_call.1} parent=1 // loop_header_branch
      %18 = sbr.rel (%p16) target = $region8
    $region5: #{tpu_custom_call.1} parent=1 // loop_body
      %s20 = ssub.s32 %s15, 1
      %s21 = ssub.s32 %s15, 2
      %s22 = sadd.s32 %s15, 1
      %s23 = ssub.s32 %s15, %s22
      %p24 = scmp.eq.s32.totalorder %s23, 0
      %s26 = sadd.s32 %s25, 1
      %s27 = scalar_select %p24, %s25, %s26
      %p30 = pneg %p24
      %p31 = scmp.eq.s32.totalorder %s15, 1
      %p32 = por %p30, %p31
      %p33 = scmp.ne.s32.totalorder %s25, %s28
      %p34 = scmp.eq.s32.totalorder %s15, 0
      %p35 = por %p33, %p34
      %p36 = scmp.ne.s32.totalorder %s25, %s28
      %p37 = scmp.eq.s32.totalorder %s20, 1
      %p38 = por %p36, %p37
      %p39 = scmp.ne.s32.totalorder %s28, %s29
      %p40 = scmp.eq.s32.totalorder %s20, 0
      %p41 = por %p39, %p40
      %p42 = scmp.ne.s32.totalorder %s28, %s29
      %p43 = scmp.eq.s32.totalorder %s21, 1
      %p44 = por %p42, %p43
      %p46 = scmp.ne.s32.totalorder %s29, %s45
      %p47 = scmp.eq.s32.totalorder %s21, 0
      %p48 = por %p46, %p47
      %s50 = sadd.s32 %s49, 1
      %p53 = scmp.eq.s32.totalorder %s15, 1
      %p54 = scmp.ne.s32.totalorder %s49, %s51
      %p55 = scmp.eq.s32.totalorder %s15, 0
      %p56 = por %p54, %p55
      %p57 = scmp.ne.s32.totalorder %s49, %s51
      %p58 = scmp.eq.s32.totalorder %s20, 1
      %p59 = por %p57, %p58
      %p60 = scmp.ne.s32.totalorder %s51, %s52
      %p61 = scmp.eq.s32.totalorder %s20, 0
      %p62 = por %p60, %p61
      %p63 = scmp.ne.s32.totalorder %s51, %s52
      %p64 = scmp.eq.s32.totalorder %s21, 1
      %p65 = por %p63, %p64
      %p67 = scmp.ne.s32.totalorder %s52, %s66
      %p68 = scmp.eq.s32.totalorder %s21, 0
      %p69 = por %p67, %p68
      %s70 = ssub.s32 %s15, %s22
      %p71 = scmp.eq.s32.totalorder %s70, 0
      %s73 = sadd.s32 %s72, 1
      %s74 = scalar_select %p71, %s72, %s73
      %p77 = pneg %p71
      %p78 = scmp.eq.s32.totalorder %s15, 1
      %p79 = por %p77, %p78
      %p80 = scmp.ne.s32.totalorder %s72, %s75
      %p81 = scmp.eq.s32.totalorder %s15, 0
      %p82 = por %p80, %p81
      %p83 = scmp.ne.s32.totalorder %s72, %s75
      %p84 = scmp.eq.s32.totalorder %s20, 1
      %p85 = por %p83, %p84
      %p86 = scmp.ne.s32.totalorder %s75, %s76
      %p87 = scmp.eq.s32.totalorder %s20, 0
      %p88 = por %p86, %p87
      %p89 = scmp.ne.s32.totalorder %s75, %s76
      %p90 = scmp.eq.s32.totalorder %s21, 1
      %p91 = por %p89, %p90
      %p93 = scmp.ne.s32.totalorder %s76, %s92
      %p94 = scmp.eq.s32.totalorder %s21, 0
      %p95 = por %p93, %p94
      %p96 = scmp.le.s32.totalorder 1, %s15
      %p97 = scmp.lt.s32.totalorder %s15, 3
      %p98 = pnand %p96, %p97
      %p99 = pneg %p98
      // Predicated region
      $region9: #{tpu_custom_call.1} parent=5 // pred_check
        _
      $region10: #{tpu_custom_call.1} parent=5 // pred_check_branch
        %101 = sbr.rel (%p98) target = $region12
      $region11: #{tpu_custom_call.1} parent=5 // pred_region
        %s102 = ssub.s32 %s15, 1
        // Predicated region
        $region13: #{tpu_custom_call.1} parent=11 // pred_check
          %p103 = pneg %p62
        $region14: #{tpu_custom_call.1} parent=11 // pred_check_branch
          %105 = sbr.rel (%p103) target = $region16
        $region15: #{tpu_custom_call.1} parent=11 // pred_region
          %s107 = ssub.s32 2048, 2048
          %108 = vsyncadd [#allocation6], %s107
          %s109 = sshll.u32 [#allocation5], 4
          %s110 = int_to_ptr.vmem [resolvable:$true] %s109
          %115 = dma.hbm_to_vmem [thread:$0]  %s1, 2048, %s110, [#allocation6], 128, 128, 8
        $region16: #{tpu_custom_call.1} parent=11 // pred_fallthru
          _
      $region12: #{tpu_custom_call.1} parent=5 // pred_fallthru
        _
      %p116 = scmp.lt.s32.totalorder %s15, 2
      // Predicated region
      $region17: #{tpu_custom_call.1} parent=5 // pred_check
        %p117 = pneg %p116
      $region18: #{tpu_custom_call.1} parent=5 // pred_check_branch
        %119 = sbr.rel (%p117) target = $region20
      $region19: #{tpu_custom_call.1} parent=5 // pred_region
        // Predicated region
        $region21: #{tpu_custom_call.1} parent=19 // pred_check
          %p120 = pneg %p35
        $region22: #{tpu_custom_call.1} parent=19 // pred_check_branch
          %122 = sbr.rel (%p120) target = $region24
        $region23: #{tpu_custom_call.1} parent=19 // pred_region
          %s123 = sand.u32 %s25, 1
          %s124 = scalar_lea.sflag [#allocation3], %s123
          %s125 = sand.u32 %s25, 1
          %s126 = smul.addr %s125, 8
          %s127 = scalar_lea.vmem [#allocation2], %s126
          %s128 = smul.u32 2, %s15
          %s130 = ssub.s32 128, 128
          %131 = vsyncadd %s124, %s130
          %s132 = smul.addr %s128, 64
          %s133 = scalar_lea.hbm %s0, %s132
          %s135 = sshll.u32 %s127, 4
          %s136 = int_to_ptr.vmem [resolvable:$true] %s135
          %138 = dma.hbm_to_vmem [thread:$0]  %s133, 128, %s136, %s124
        $region24: #{tpu_custom_call.1} parent=19 // pred_fallthru
          _
      $region20: #{tpu_custom_call.1} parent=5 // pred_fallthru
        _
      %p139 = scmp.le.s32.totalorder 1, %s15
      %p140 = scmp.lt.s32.totalorder %s15, 3
      %p141 = pnand %p139, %p140
      %p142 = pneg %p141
      // Predicated region
      $region25: #{tpu_custom_call.1} parent=5 // pred_check
        _
      $region26: #{tpu_custom_call.1} parent=5 // pred_check_branch
        %144 = sbr.rel (%p141) target = $region28
      $region27: #{tpu_custom_call.1} parent=5 // pred_region
        %s145 = ssub.s32 %s15, 1
        %s146 = sand.u32 %s28, 1
        %s147 = scalar_lea.sflag [#allocation3], %s146
        %s148 = sand.u32 %s28, 1
        %s149 = smul.addr %s148, 8
        %s150 = scalar_lea.vmem [#allocation2], %s149
        // Predicated region
        $region29: #{tpu_custom_call.1} parent=27 // pred_check
          %p151 = pneg %p41
        $region30: #{tpu_custom_call.1} parent=27 // pred_check_branch
          %153 = sbr.rel (%p151) target = $region32
        $region31: #{tpu_custom_call.1} parent=27 // pred_region
          %154 = dma.done %s147, 128
        $region32: #{tpu_custom_call.1} parent=27 // pred_fallthru
          _
        // Predicated region
        $region33: #{tpu_custom_call.1} parent=27 // pred_check
          %p155 = pneg %p62
        $region34: #{tpu_custom_call.1} parent=27 // pred_check_branch
          %157 = sbr.rel (%p155) target = $region36
        $region35: #{tpu_custom_call.1} parent=27 // pred_region
          %158 = dma.done [#allocation6], 2048
        $region36: #{tpu_custom_call.1} parent=27 // pred_fallthru
          _
        %s159 = sand.u32 %s28, 1
        %s160 = scalar_lea.sflag [#allocation3], %s159
        %s161 = sand.u32 %s28, 1
        %s162 = smul.addr %s161, 8
        %s163 = scalar_lea.vmem [#allocation2], %s162
        %p164 = pneg %p41
        %p165 = pneg %p38
        %p166 = pneg %p62
        %p167 = pneg %p59
        %p168 = pneg %p88
        %p169 = pneg %p85
        %s170 = sand.u32 %s75, 1
        %s171 = scalar_lea.sflag [#allocation4], %s170
        %s172 = sand.u32 %s75, 1
        %s173 = smul.addr %s172, 2
        %s174 = scalar_lea.vmem [#allocation7], %s173
        %s175 = smul.u32 2, %s20
        %s176 = smul.u32 2, %s20
        %v177 = vld [vmem:[%s150] sm:$0xff]
        %v178 = vlaneseq
        %v179 = vshrl.u32 %v178, 7
        %v180 = vadd.s32 %v179, 8
        %v181 = vadd.s32 %v179, 16
        %v182 = vadd.s32 %v179, 24
        %v183 = vadd.s32 %v179, 32
        %v184 = vadd.s32 %v179, 40
        %v185 = vadd.s32 %v179, 48
        %v186 = vadd.s32 %v179, 56
        %v187 = vadd.s32 %v179, 64
        %v188 = vadd.s32 %v179, 72
        %v189 = vadd.s32 %v179, 80
        %v190 = vadd.s32 %v179, 88
        %v191 = vadd.s32 %v179, 96
        %v192 = vadd.s32 %v179, 104
        %v193 = vadd.s32 %v179, 112
        %v194 = vadd.s32 %v179, 120
        %v195 = vlaneseq
        %v196 = vshrl.u32 %v195, 7
        %v197 = vsub.s32 0, %v196
        %v198 = vrot.slane %v177, %v197
        %v199 = vlaneseq
        %v200 = vshrl.u32 %v199, 7
        %v201 = vsub.s32 4, %v200
        %v202 = vrot.slane %v177, %v201
        %v203 = vlaneseq
        %v204 = vshrl.u32 %v203, 7
        %v205 = vsub.s32 0, %v204
        %v206 = vrot.slane %v198, %v205
        %v207 = vlaneseq
        %v208 = vshrl.u32 %v207, 7
        %v209 = vsub.s32 0, %v208
        %v210 = vrot.slane %v202, %v209
        %vm211 = vcmp.eq.s32.totalorder %v179, %v206
        %vm212 = vcmp.eq.s32.totalorder %v179, %v210
        %vm213 = vcmp.eq.s32.totalorder %v180, %v206
        %vm214 = vcmp.eq.s32.totalorder %v180, %v210
        %vm215 = vcmp.eq.s32.totalorder %v181, %v206
        %vm216 = vcmp.eq.s32.totalorder %v181, %v210
        %vm217 = vcmp.eq.s32.totalorder %v182, %v206
        %vm218 = vcmp.eq.s32.totalorder %v182, %v210
        %vm219 = vcmp.eq.s32.totalorder %v183, %v206
        %vm220 = vcmp.eq.s32.totalorder %v183, %v210
        %vm221 = vcmp.eq.s32.totalorder %v184, %v206
        %vm222 = vcmp.eq.s32.totalorder %v184, %v210
        %vm223 = vcmp.eq.s32.totalorder %v185, %v206
        %vm224 = vcmp.eq.s32.totalorder %v185, %v210
        %vm225 = vcmp.eq.s32.totalorder %v186, %v206
        %vm226 = vcmp.eq.s32.totalorder %v186, %v210
        %vm227 = vcmp.eq.s32.totalorder %v187, %v206
        %vm228 = vcmp.eq.s32.totalorder %v187, %v210
        %vm229 = vcmp.eq.s32.totalorder %v188, %v206
        %vm230 = vcmp.eq.s32.totalorder %v188, %v210
        %vm231 = vcmp.eq.s32.totalorder %v189, %v206
        %vm232 = vcmp.eq.s32.totalorder %v189, %v210
        %vm233 = vcmp.eq.s32.totalorder %v190, %v206
        %vm234 = vcmp.eq.s32.totalorder %v190, %v210
        %vm235 = vcmp.eq.s32.totalorder %v191, %v206
        %vm236 = vcmp.eq.s32.totalorder %v191, %v210
        %vm237 = vcmp.eq.s32.totalorder %v192, %v206
        %vm238 = vcmp.eq.s32.totalorder %v192, %v210
        %vm239 = vcmp.eq.s32.totalorder %v193, %v206
        %vm240 = vcmp.eq.s32.totalorder %v193, %v210
        %vm241 = vcmp.eq.s32.totalorder %v194, %v206
        %vm242 = vcmp.eq.s32.totalorder %v194, %v210
        %v243 = vsel %vm211, 1, 0
        %v244 = vsel %vm212, 1, 0
        %v245 = vsel %vm213, 1, 0
        %v246 = vsel %vm214, 1, 0
        %v247 = vsel %vm215, 1, 0
        %v248 = vsel %vm216, 1, 0
        %v249 = vsel %vm217, 1, 0
        %v250 = vsel %vm218, 1, 0
        %v251 = vsel %vm219, 1, 0
        %v252 = vsel %vm220, 1, 0
        %v253 = vsel %vm221, 1, 0
        %v254 = vsel %vm222, 1, 0
        %v255 = vsel %vm223, 1, 0
        %v256 = vsel %vm224, 1, 0
        %v257 = vsel %vm225, 1, 0
        %v258 = vsel %vm226, 1, 0
        %v259 = vsel %vm227, 1, 0
        %v260 = vsel %vm228, 1, 0
        %v261 = vsel %vm229, 1, 0
        %v262 = vsel %vm230, 1, 0
        %v263 = vsel %vm231, 1, 0
        %v264 = vsel %vm232, 1, 0
        %v265 = vsel %vm233, 1, 0
        %v266 = vsel %vm234, 1, 0
        %v267 = vsel %vm235, 1, 0
        %v268 = vsel %vm236, 1, 0
        %v269 = vsel %vm237, 1, 0
        %v270 = vsel %vm238, 1, 0
        %v271 = vsel %vm239, 1, 0
        %v272 = vsel %vm240, 1, 0
        %v273 = vsel %vm241, 1, 0
        %v274 = vsel %vm242, 1, 0
        %v275 = vlaneseq
        %v276 = vshrl.u32 %v275, 7
        %v277 = vsub.s32 1, %v276
        %v278 = vrot.slane %v177, %v277
        %v279 = vlaneseq
        %v280 = vshrl.u32 %v279, 7
        %v281 = vsub.s32 5, %v280
        %v282 = vrot.slane %v177, %v281
        %v283 = vlaneseq
        %v284 = vshrl.u32 %v283, 7
        %v285 = vsub.s32 1, %v284
        %v286 = vrot.slane %v278, %v285
        %v287 = vlaneseq
        %v288 = vshrl.u32 %v287, 7
        %v289 = vsub.s32 1, %v288
        %v290 = vrot.slane %v282, %v289
        %vm291 = vcmp.eq.s32.totalorder %v179, %v286
        %vm292 = vcmp.eq.s32.totalorder %v179, %v290
        %vm293 = vcmp.eq.s32.totalorder %v180, %v286
        %vm294 = vcmp.eq.s32.totalorder %v180, %v290
        %vm295 = vcmp.eq.s32.totalorder %v181, %v286
        %vm296 = vcmp.eq.s32.totalorder %v181, %v290
        %vm297 = vcmp.eq.s32.totalorder %v182, %v286
        %vm298 = vcmp.eq.s32.totalorder %v182, %v290
        %vm299 = vcmp.eq.s32.totalorder %v183, %v286
        %vm300 = vcmp.eq.s32.totalorder %v183, %v290
        %vm301 = vcmp.eq.s32.totalorder %v184, %v286
        %vm302 = vcmp.eq.s32.totalorder %v184, %v290
        %vm303 = vcmp.eq.s32.totalorder %v185, %v286
        %vm304 = vcmp.eq.s32.totalorder %v185, %v290
        %vm305 = vcmp.eq.s32.totalorder %v186, %v286
        %vm306 = vcmp.eq.s32.totalorder %v186, %v290
        %vm307 = vcmp.eq.s32.totalorder %v187, %v286
        %vm308 = vcmp.eq.s32.totalorder %v187, %v290
        %vm309 = vcmp.eq.s32.totalorder %v188, %v286
        %vm310 = vcmp.eq.s32.totalorder %v188, %v290
        %vm311 = vcmp.eq.s32.totalorder %v189, %v286
        %vm312 = vcmp.eq.s32.totalorder %v189, %v290
        %vm313 = vcmp.eq.s32.totalorder %v190, %v286
        %vm314 = vcmp.eq.s32.totalorder %v190, %v290
        %vm315 = vcmp.eq.s32.totalorder %v191, %v286
        %vm316 = vcmp.eq.s32.totalorder %v191, %v290
        %vm317 = vcmp.eq.s32.totalorder %v192, %v286
        %vm318 = vcmp.eq.s32.totalorder %v192, %v290
        %vm319 = vcmp.eq.s32.totalorder %v193, %v286
        %vm320 = vcmp.eq.s32.totalorder %v193, %v290
        %vm321 = vcmp.eq.s32.totalorder %v194, %v286
        %vm322 = vcmp.eq.s32.totalorder %v194, %v290
        %v323 = vsel %vm291, 1, 0
        %v324 = vsel %vm292, 1, 0
        %v325 = vsel %vm293, 1, 0
        %v326 = vsel %vm294, 1, 0
        %v327 = vsel %vm295, 1, 0
        %v328 = vsel %vm296, 1, 0
        %v329 = vsel %vm297, 1, 0
        %v330 = vsel %vm298, 1, 0
        %v331 = vsel %vm299, 1, 0
        %v332 = vsel %vm300, 1, 0
        %v333 = vsel %vm301, 1, 0
        %v334 = vsel %vm302, 1, 0
        %v335 = vsel %vm303, 1, 0
        %v336 = vsel %vm304, 1, 0
        %v337 = vsel %vm305, 1, 0
        %v338 = vsel %vm306, 1, 0
        %v339 = vsel %vm307, 1, 0
        %v340 = vsel %vm308, 1, 0
        %v341 = vsel %vm309, 1, 0
        %v342 = vsel %vm310, 1, 0
        %v343 = vsel %vm311, 1, 0
        %v344 = vsel %vm312, 1, 0
        %v345 = vsel %vm313, 1, 0
        %v346 = vsel %vm314, 1, 0
        %v347 = vsel %vm315, 1, 0
        %v348 = vsel %vm316, 1, 0
        %v349 = vsel %vm317, 1, 0
        %v350 = vsel %vm318, 1, 0
        %v351 = vsel %vm319, 1, 0
        %v352 = vsel %vm320, 1, 0
        %v353 = vsel %vm321, 1, 0
        %v354 = vsel %vm322, 1, 0
        %v355 = vadd.s32 %v243, %v323
        %v356 = vadd.s32 %v244, %v324
        %v357 = vadd.s32 %v245, %v325
        %v358 = vadd.s32 %v246, %v326
        %v359 = vadd.s32 %v247, %v327
        %v360 = vadd.s32 %v248, %v328
        %v361 = vadd.s32 %v249, %v329
        %v362 = vadd.s32 %v250, %v330
        %v363 = vadd.s32 %v251, %v331
        %v364 = vadd.s32 %v252, %v332
        %v365 = vadd.s32 %v253, %v333
        %v366 = vadd.s32 %v254, %v334
        %v367 = vadd.s32 %v255, %v335
        %v368 = vadd.s32 %v256, %v336
        %v369 = vadd.s32 %v257, %v337
        %v370 = vadd.s32 %v258, %v338
        %v371 = vadd.s32 %v259, %v339
        %v372 = vadd.s32 %v260, %v340
        %v373 = vadd.s32 %v261, %v341
        %v374 = vadd.s32 %v262, %v342
        %v375 = vadd.s32 %v263, %v343
        %v376 = vadd.s32 %v264, %v344
        %v377 = vadd.s32 %v265, %v345
        %v378 = vadd.s32 %v266, %v346
        %v379 = vadd.s32 %v267, %v347
        %v380 = vadd.s32 %v268, %v348
        %v381 = vadd.s32 %v269, %v349
        %v382 = vadd.s32 %v270, %v350
        %v383 = vadd.s32 %v271, %v351
        %v384 = vadd.s32 %v272, %v352
        %v385 = vadd.s32 %v273, %v353
        %v386 = vadd.s32 %v274, %v354
        %v387 = vlaneseq
        %v388 = vshrl.u32 %v387, 7
        %v389 = vsub.s32 2, %v388
        %v390 = vrot.slane %v177, %v389
        %v391 = vlaneseq
        %v392 = vshrl.u32 %v391, 7
        %v393 = vsub.s32 6, %v392
        %v394 = vrot.slane %v177, %v393
        %v395 = vlaneseq
        %v396 = vshrl.u32 %v395, 7
        %v397 = vsub.s32 2, %v396
        %v398 = vrot.slane %v390, %v397
        %v399 = vlaneseq
        %v400 = vshrl.u32 %v399, 7
        %v401 = vsub.s32 2, %v400
        %v402 = vrot.slane %v394, %v401
        %vm403 = vcmp.eq.s32.totalorder %v179, %v398
        %vm404 = vcmp.eq.s32.totalorder %v179, %v402
        %vm405 = vcmp.eq.s32.totalorder %v180, %v398
        %vm406 = vcmp.eq.s32.totalorder %v180, %v402
        %vm407 = vcmp.eq.s32.totalorder %v181, %v398
        %vm408 = vcmp.eq.s32.totalorder %v181, %v402
        %vm409 = vcmp.eq.s32.totalorder %v182, %v398
        %vm410 = vcmp.eq.s32.totalorder %v182, %v402
        %vm411 = vcmp.eq.s32.totalorder %v183, %v398
        %vm412 = vcmp.eq.s32.totalorder %v183, %v402
        %vm413 = vcmp.eq.s32.totalorder %v184, %v398
        %vm414 = vcmp.eq.s32.totalorder %v184, %v402
        %vm415 = vcmp.eq.s32.totalorder %v185, %v398
        %vm416 = vcmp.eq.s32.totalorder %v185, %v402
        %vm417 = vcmp.eq.s32.totalorder %v186, %v398
        %vm418 = vcmp.eq.s32.totalorder %v186, %v402
        %vm419 = vcmp.eq.s32.totalorder %v187, %v398
        %vm420 = vcmp.eq.s32.totalorder %v187, %v402
        %vm421 = vcmp.eq.s32.totalorder %v188, %v398
        %vm422 = vcmp.eq.s32.totalorder %v188, %v402
        %vm423 = vcmp.eq.s32.totalorder %v189, %v398
        %vm424 = vcmp.eq.s32.totalorder %v189, %v402
        %vm425 = vcmp.eq.s32.totalorder %v190, %v398
        %vm426 = vcmp.eq.s32.totalorder %v190, %v402
        %vm427 = vcmp.eq.s32.totalorder %v191, %v398
        %vm428 = vcmp.eq.s32.totalorder %v191, %v402
        %vm429 = vcmp.eq.s32.totalorder %v192, %v398
        %vm430 = vcmp.eq.s32.totalorder %v192, %v402
        %vm431 = vcmp.eq.s32.totalorder %v193, %v398
        %vm432 = vcmp.eq.s32.totalorder %v193, %v402
        %vm433 = vcmp.eq.s32.totalorder %v194, %v398
        %vm434 = vcmp.eq.s32.totalorder %v194, %v402
        %v435 = vsel %vm403, 1, 0
        %v436 = vsel %vm404, 1, 0
        %v437 = vsel %vm405, 1, 0
        %v438 = vsel %vm406, 1, 0
        %v439 = vsel %vm407, 1, 0
        %v440 = vsel %vm408, 1, 0
        %v441 = vsel %vm409, 1, 0
        %v442 = vsel %vm410, 1, 0
        %v443 = vsel %vm411, 1, 0
        %v444 = vsel %vm412, 1, 0
        %v445 = vsel %vm413, 1, 0
        %v446 = vsel %vm414, 1, 0
        %v447 = vsel %vm415, 1, 0
        %v448 = vsel %vm416, 1, 0
        %v449 = vsel %vm417, 1, 0
        %v450 = vsel %vm418, 1, 0
        %v451 = vsel %vm419, 1, 0
        %v452 = vsel %vm420, 1, 0
        %v453 = vsel %vm421, 1, 0
        %v454 = vsel %vm422, 1, 0
        %v455 = vsel %vm423, 1, 0
        %v456 = vsel %vm424, 1, 0
        %v457 = vsel %vm425, 1, 0
        %v458 = vsel %vm426, 1, 0
        %v459 = vsel %vm427, 1, 0
        %v460 = vsel %vm428, 1, 0
        %v461 = vsel %vm429, 1, 0
        %v462 = vsel %vm430, 1, 0
        %v463 = vsel %vm431, 1, 0
        %v464 = vsel %vm432, 1, 0
        %v465 = vsel %vm433, 1, 0
        %v466 = vsel %vm434, 1, 0
        %v467 = vadd.s32 %v355, %v435
        %v468 = vadd.s32 %v356, %v436
        %v469 = vadd.s32 %v357, %v437
        %v470 = vadd.s32 %v358, %v438
        %v471 = vadd.s32 %v359, %v439
        %v472 = vadd.s32 %v360, %v440
        %v473 = vadd.s32 %v361, %v441
        %v474 = vadd.s32 %v362, %v442
        %v475 = vadd.s32 %v363, %v443
        %v476 = vadd.s32 %v364, %v444
        %v477 = vadd.s32 %v365, %v445
        %v478 = vadd.s32 %v366, %v446
        %v479 = vadd.s32 %v367, %v447
        %v480 = vadd.s32 %v368, %v448
        %v481 = vadd.s32 %v369, %v449
        %v482 = vadd.s32 %v370, %v450
        %v483 = vadd.s32 %v371, %v451
        %v484 = vadd.s32 %v372, %v452
        %v485 = vadd.s32 %v373, %v453
        %v486 = vadd.s32 %v374, %v454
        %v487 = vadd.s32 %v375, %v455
        %v488 = vadd.s32 %v376, %v456
        %v489 = vadd.s32 %v377, %v457
        %v490 = vadd.s32 %v378, %v458
        %v491 = vadd.s32 %v379, %v459
        %v492 = vadd.s32 %v380, %v460
        %v493 = vadd.s32 %v381, %v461
        %v494 = vadd.s32 %v382, %v462
        %v495 = vadd.s32 %v383, %v463
        %v496 = vadd.s32 %v384, %v464
        %v497 = vadd.s32 %v385, %v465
        %v498 = vadd.s32 %v386, %v466
        %v499 = vlaneseq
        %v500 = vshrl.u32 %v499, 7
        %v501 = vsub.s32 3, %v500
        %v502 = vrot.slane %v177, %v501
        %v503 = vlaneseq
        %v504 = vshrl.u32 %v503, 7
        %v505 = vsub.s32 7, %v504
        %v506 = vrot.slane %v177, %v505
        %v507 = vlaneseq
        %v508 = vshrl.u32 %v507, 7
        %v509 = vsub.s32 3, %v508
        %v510 = vrot.slane %v502, %v509
        %v511 = vlaneseq
        %v512 = vshrl.u32 %v511, 7
        %v513 = vsub.s32 3, %v512
        %v514 = vrot.slane %v506, %v513
        %vm515 = vcmp.eq.s32.totalorder %v179, %v510
        %vm516 = vcmp.eq.s32.totalorder %v179, %v514
        %vm517 = vcmp.eq.s32.totalorder %v180, %v510
        %vm518 = vcmp.eq.s32.totalorder %v180, %v514
        %vm519 = vcmp.eq.s32.totalorder %v181, %v510
        %vm520 = vcmp.eq.s32.totalorder %v181, %v514
        %vm521 = vcmp.eq.s32.totalorder %v182, %v510
        %vm522 = vcmp.eq.s32.totalorder %v182, %v514
        %vm523 = vcmp.eq.s32.totalorder %v183, %v510
        %vm524 = vcmp.eq.s32.totalorder %v183, %v514
        %vm525 = vcmp.eq.s32.totalorder %v184, %v510
        %vm526 = vcmp.eq.s32.totalorder %v184, %v514
        %vm527 = vcmp.eq.s32.totalorder %v185, %v510
        %vm528 = vcmp.eq.s32.totalorder %v185, %v514
        %vm529 = vcmp.eq.s32.totalorder %v186, %v510
        %vm530 = vcmp.eq.s32.totalorder %v186, %v514
        %vm531 = vcmp.eq.s32.totalorder %v187, %v510
        %vm532 = vcmp.eq.s32.totalorder %v187, %v514
        %vm533 = vcmp.eq.s32.totalorder %v188, %v510
        %vm534 = vcmp.eq.s32.totalorder %v188, %v514
        %vm535 = vcmp.eq.s32.totalorder %v189, %v510
        %vm536 = vcmp.eq.s32.totalorder %v189, %v514
        %vm537 = vcmp.eq.s32.totalorder %v190, %v510
        %vm538 = vcmp.eq.s32.totalorder %v190, %v514
        %vm539 = vcmp.eq.s32.totalorder %v191, %v510
        %vm540 = vcmp.eq.s32.totalorder %v191, %v514
        %vm541 = vcmp.eq.s32.totalorder %v192, %v510
        %vm542 = vcmp.eq.s32.totalorder %v192, %v514
        %vm543 = vcmp.eq.s32.totalorder %v193, %v510
        %vm544 = vcmp.eq.s32.totalorder %v193, %v514
        %vm545 = vcmp.eq.s32.totalorder %v194, %v510
        %vm546 = vcmp.eq.s32.totalorder %v194, %v514
        %v547 = vsel %vm515, 1, 0
        %v548 = vsel %vm516, 1, 0
        %v549 = vsel %vm517, 1, 0
        %v550 = vsel %vm518, 1, 0
        %v551 = vsel %vm519, 1, 0
        %v552 = vsel %vm520, 1, 0
        %v553 = vsel %vm521, 1, 0
        %v554 = vsel %vm522, 1, 0
        %v555 = vsel %vm523, 1, 0
        %v556 = vsel %vm524, 1, 0
        %v557 = vsel %vm525, 1, 0
        %v558 = vsel %vm526, 1, 0
        %v559 = vsel %vm527, 1, 0
        %v560 = vsel %vm528, 1, 0
        %v561 = vsel %vm529, 1, 0
        %v562 = vsel %vm530, 1, 0
        %v563 = vsel %vm531, 1, 0
        %v564 = vsel %vm532, 1, 0
        %v565 = vsel %vm533, 1, 0
        %v566 = vsel %vm534, 1, 0
        %v567 = vsel %vm535, 1, 0
        %v568 = vsel %vm536, 1, 0
        %v569 = vsel %vm537, 1, 0
        %v570 = vsel %vm538, 1, 0
        %v571 = vsel %vm539, 1, 0
        %v572 = vsel %vm540, 1, 0
        %v573 = vsel %vm541, 1, 0
        %v574 = vsel %vm542, 1, 0
        %v575 = vsel %vm543, 1, 0
        %v576 = vsel %vm544, 1, 0
        %v577 = vsel %vm545, 1, 0
        %v578 = vsel %vm546, 1, 0
        %v579 = vadd.s32 %v467, %v547
        %v580 = vadd.s32 %v468, %v548
        %v581 = vadd.s32 %v469, %v549
        %v582 = vadd.s32 %v470, %v550
        %v583 = vadd.s32 %v471, %v551
        %v584 = vadd.s32 %v472, %v552
        %v585 = vadd.s32 %v473, %v553
        %v586 = vadd.s32 %v474, %v554
        %v587 = vadd.s32 %v475, %v555
        %v588 = vadd.s32 %v476, %v556
        %v589 = vadd.s32 %v477, %v557
        %v590 = vadd.s32 %v478, %v558
        %v591 = vadd.s32 %v479, %v559
        %v592 = vadd.s32 %v480, %v560
        %v593 = vadd.s32 %v481, %v561
        %v594 = vadd.s32 %v482, %v562
        %v595 = vadd.s32 %v483, %v563
        %v596 = vadd.s32 %v484, %v564
        %v597 = vadd.s32 %v485, %v565
        %v598 = vadd.s32 %v486, %v566
        %v599 = vadd.s32 %v487, %v567
        %v600 = vadd.s32 %v488, %v568
        %v601 = vadd.s32 %v489, %v569
        %v602 = vadd.s32 %v490, %v570
        %v603 = vadd.s32 %v491, %v571
        %v604 = vadd.s32 %v492, %v572
        %v605 = vadd.s32 %v493, %v573
        %v606 = vadd.s32 %v494, %v574
        %v607 = vadd.s32 %v495, %v575
        %v608 = vadd.s32 %v496, %v576
        %v609 = vadd.s32 %v497, %v577
        %v610 = vadd.s32 %v498, %v578
        %v611 = vcvt.s32.f32 %v579
        %v612 = vcvt.s32.f32 %v580
        %v613 = vcvt.s32.f32 %v581
        %v614 = vcvt.s32.f32 %v582
        %v615 = vcvt.s32.f32 %v583
        %v616 = vcvt.s32.f32 %v584
        %v617 = vcvt.s32.f32 %v585
        %v618 = vcvt.s32.f32 %v586
        %v619 = vcvt.s32.f32 %v587
        %v620 = vcvt.s32.f32 %v588
        %v621 = vcvt.s32.f32 %v589
        %v622 = vcvt.s32.f32 %v590
        %v623 = vcvt.s32.f32 %v591
        %v624 = vcvt.s32.f32 %v592
        %v625 = vcvt.s32.f32 %v593
        %v626 = vcvt.s32.f32 %v594
        %v627 = vcvt.s32.f32 %v595
        %v628 = vcvt.s32.f32 %v596
        %v629 = vcvt.s32.f32 %v597
        %v630 = vcvt.s32.f32 %v598
        %v631 = vcvt.s32.f32 %v599
        %v632 = vcvt.s32.f32 %v600
        %v633 = vcvt.s32.f32 %v601
        %v634 = vcvt.s32.f32 %v602
        %v635 = vcvt.s32.f32 %v603
        %v636 = vcvt.s32.f32 %v604
        %v637 = vcvt.s32.f32 %v605
        %v638 = vcvt.s32.f32 %v606
        %v639 = vcvt.s32.f32 %v607
        %v640 = vcvt.s32.f32 %v608
        %v641 = vcvt.s32.f32 %v609
        %v642 = vcvt.s32.f32 %v610
        %v643 = vld [vmem:[#allocation5] sm:$0xff]
        %v644 = vld [vmem:[#allocation5 + $0x8] sm:$0xff]
        %v645 = vld [vmem:[#allocation5 + $0x10] sm:$0xff]
        %v646 = vld [vmem:[#allocation5 + $0x18] sm:$0xff]
        %v647 = vld [vmem:[#allocation5 + $0x20] sm:$0xff]
        %v648 = vld [vmem:[#allocation5 + $0x28] sm:$0xff]
        %v649 = vld [vmem:[#allocation5 + $0x30] sm:$0xff]
        %v650 = vld [vmem:[#allocation5 + $0x38] sm:$0xff]
        %v651 = vld [vmem:[#allocation5 + $0x40] sm:$0xff]
        %v652 = vld [vmem:[#allocation5 + $0x48] sm:$0xff]
        %v653 = vld [vmem:[#allocation5 + $0x50] sm:$0xff]
        %v654 = vld [vmem:[#allocation5 + $0x58] sm:$0xff]
        %v655 = vld [vmem:[#allocation5 + $0x60] sm:$0xff]
        %v656 = vld [vmem:[#allocation5 + $0x68] sm:$0xff]
        %v657 = vld [vmem:[#allocation5 + $0x70] sm:$0xff]
        %v658 = vld [vmem:[#allocation5 + $0x78] sm:$0xff]
        %659 = vmatprep.subr.mxu0 %v612
        %660 = vmatpush1.msra.mxu0 %v611
        %661 = vmatprep.subr.mxu0 %v614
        %662 = vmatpush1.msra.mxu0 %v613
        %663 = vmatprep.subr.mxu0 %v616
        %664 = vmatpush1.msra.mxu0 %v615
        %665 = vmatprep.subr.mxu0 %v618
        %666 = vmatpush1.msra.mxu0 %v617
        %667 = vmatprep.subr.mxu0 %v620
        %668 = vmatpush1.msra.mxu0 %v619
        %669 = vmatprep.subr.mxu0 %v622
        %670 = vmatpush1.msra.mxu0 %v621
        %671 = vmatprep.subr.mxu0 %v624
        %672 = vmatpush1.msra.mxu0 %v623
        %673 = vmatprep.subr.mxu0 %v626
        %674 = vmatpush1.msra.mxu0 %v625
        %675 = vmatprep.subr.mxu0 %v628
        %676 = vmatpush1.msra.mxu0 %v627
        %677 = vmatprep.subr.mxu0 %v630
        %678 = vmatpush1.msra.mxu0 %v629
        %679 = vmatprep.subr.mxu0 %v632
        %680 = vmatpush1.msra.mxu0 %v631
        %681 = vmatprep.subr.mxu0 %v634
        %682 = vmatpush1.msra.mxu0 %v633
        %683 = vmatprep.subr.mxu0 %v636
        %684 = vmatpush1.msra.mxu0 %v635
        %685 = vmatprep.subr.mxu0 %v638
        %686 = vmatpush1.msra.mxu0 %v637
        %687 = vmatprep.subr.mxu0 %v640
        %688 = vmatpush1.msra.mxu0 %v639
        %689 = vmatprep.subr.mxu0 %v642
        %690 = vmatpush1.msra.mxu0 %v641
        %691 = vmatprep.subr.mxu0 0.0
        %692 = vmatpush1.msra.mxu0 0.0
        %693 = vmatprep.subr.mxu0 0.0
        %694 = vmatpush1.msra.mxu0 0.0
        %695 = vmatprep.subr.mxu0 0.0
        %696 = vmatpush1.msra.mxu0 0.0
        %697 = vmatprep.subr.mxu0 0.0
        %698 = vmatpush1.msra.mxu0 0.0
        %699 = vmatprep.subr.mxu0 0.0
        %700 = vmatpush1.msra.mxu0 0.0
        %701 = vmatprep.subr.mxu0 0.0
        %702 = vmatpush1.msra.mxu0 0.0
        %703 = vmatprep.subr.mxu0 0.0
        %704 = vmatpush1.msra.mxu0 0.0
        %705 = vmatprep.subr.mxu0 0.0
        %706 = vmatpush1.msra.mxu0 0.0
        %707 = vmatprep.subr.mxu0 0.0
        %708 = vmatpush1.msra.mxu0 0.0
        %709 = vmatprep.subr.mxu0 0.0
        %710 = vmatpush1.msra.mxu0 0.0
        %711 = vmatprep.subr.mxu0 0.0
        %712 = vmatpush1.msra.mxu0 0.0
        %713 = vmatprep.subr.mxu0 0.0
        %714 = vmatpush1.msra.mxu0 0.0
        %715 = vmatprep.subr.mxu0 0.0
        %716 = vmatpush1.msra.mxu0 0.0
        %717 = vmatprep.subr.mxu0 0.0
        %718 = vmatpush1.msra.mxu0 0.0
        %719 = vmatprep.subr.mxu0 0.0
        %720 = vmatpush1.msra.mxu0 0.0
        %721 = vmatprep.subr.mxu0 0.0
        %722 = vmatpush1.msra.mxu0 0.0
        %723 = vmatprep.mubr.f32.mxu0 0.0
        %724 = vmatmul.mubr.f32.gmra.mrb[0].mxu0 %v643
        %v725 = vpop.f32.mrb[0].mxu0
        %v726 = vadd.f32 0.0, %v725
        %v727 = vpop.f32.mrb[0].mxu0
        %v728 = vadd.f32 0.0, %v727
        %729 = vmatprep.mubr.f32.mxu0 0.0
        %730 = vmatmul.mubr.f32.gmra.mrb[0].mxu0 %v644
        %v731 = vpop.f32.mrb[0].mxu0
        %v732 = vadd.f32 0.0, %v731
        %v733 = vpop.f32.mrb[0].mxu0
        %v734 = vadd.f32 0.0, %v733
        %735 = vmatprep.mubr.f32.mxu0 0.0
        %736 = vmatmul.mubr.f32.gmra.mrb[0].mxu0 %v645
        %v737 = vpop.f32.mrb[0].mxu0
        %v738 = vadd.f32 0.0, %v737
        %v739 = vpop.f32.mrb[0].mxu0
        %v740 = vadd.f32 0.0, %v739
        %741 = vmatprep.mubr.f32.mxu0 0.0
        %742 = vmatmul.mubr.f32.gmra.mrb[0].mxu0 %v646
        %v743 = vpop.f32.mrb[0].mxu0
        %v744 = vadd.f32 0.0, %v743
        %v745 = vpop.f32.mrb[0].mxu0
        %v746 = vadd.f32 0.0, %v745
        %747 = vmatprep.mubr.f32.mxu0 0.0
        %748 = vmatmul.mubr.f32.gmra.mrb[0].mxu0 %v647
        %v749 = vpop.f32.mrb[0].mxu0
        %v750 = vadd.f32 0.0, %v749
        %v751 = vpop.f32.mrb[0].mxu0
        %v752 = vadd.f32 0.0, %v751
        %753 = vmatprep.mubr.f32.mxu0 0.0
        %754 = vmatmul.mubr.f32.gmra.mrb[0].mxu0 %v648
        %v755 = vpop.f32.mrb[0].mxu0
        %v756 = vadd.f32 0.0, %v755
        %v757 = vpop.f32.mrb[0].mxu0
        %v758 = vadd.f32 0.0, %v757
        %759 = vmatprep.mubr.f32.mxu0 0.0
        %760 = vmatmul.mubr.f32.gmra.mrb[0].mxu0 %v649
        %v761 = vpop.f32.mrb[0].mxu0
        %v762 = vadd.f32 0.0, %v761
        %v763 = vpop.f32.mrb[0].mxu0
        %v764 = vadd.f32 0.0, %v763
        %765 = vmatprep.mubr.f32.mxu0 0.0
        %766 = vmatmul.mubr.f32.gmra.mrb[0].mxu0 %v650
        %v767 = vpop.f32.mrb[0].mxu0
        %v768 = vadd.f32 0.0, %v767
        %v769 = vpop.f32.mrb[0].mxu0
        %v770 = vadd.f32 0.0, %v769
        %771 = vmatprep.mubr.f32.mxu0 0.0
        %772 = vmatmul.mubr.f32.gmra.mrb[0].mxu0 %v651
        %v773 = vpop.f32.mrb[0].mxu0
        %v774 = vadd.f32 0.0, %v773
        %v775 = vpop.f32.mrb[0].mxu0
        %v776 = vadd.f32 0.0, %v775
        %777 = vmatprep.mubr.f32.mxu0 0.0
        %778 = vmatmul.mubr.f32.gmra.mrb[0].mxu0 %v652
        %v779 = vpop.f32.mrb[0].mxu0
        %v780 = vadd.f32 0.0, %v779
        %v781 = vpop.f32.mrb[0].mxu0
        %v782 = vadd.f32 0.0, %v781
        %783 = vmatprep.mubr.f32.mxu0 0.0
        %784 = vmatmul.mubr.f32.gmra.mrb[0].mxu0 %v653
        %v785 = vpop.f32.mrb[0].mxu0
        %v786 = vadd.f32 0.0, %v785
        %v787 = vpop.f32.mrb[0].mxu0
        %v788 = vadd.f32 0.0, %v787
        %789 = vmatprep.mubr.f32.mxu0 0.0
        %790 = vmatmul.mubr.f32.gmra.mrb[0].mxu0 %v654
        %v791 = vpop.f32.mrb[0].mxu0
        %v792 = vadd.f32 0.0, %v791
        %v793 = vpop.f32.mrb[0].mxu0
        %v794 = vadd.f32 0.0, %v793
        %795 = vmatprep.mubr.f32.mxu0 0.0
        %796 = vmatmul.mubr.f32.gmra.mrb[0].mxu0 %v655
        %v797 = vpop.f32.mrb[0].mxu0
        %v798 = vadd.f32 0.0, %v797
        %v799 = vpop.f32.mrb[0].mxu0
        %v800 = vadd.f32 0.0, %v799
        %801 = vmatprep.mubr.f32.mxu0 0.0
        %802 = vmatmul.mubr.f32.gmra.mrb[0].mxu0 %v656
        %v803 = vpop.f32.mrb[0].mxu0
        %v804 = vadd.f32 0.0, %v803
        %v805 = vpop.f32.mrb[0].mxu0
        %v806 = vadd.f32 0.0, %v805
        %807 = vmatprep.mubr.f32.mxu0 0.0
        %808 = vmatmul.mubr.f32.gmra.mrb[0].mxu0 %v657
        %v809 = vpop.f32.mrb[0].mxu0
        %v810 = vadd.f32 0.0, %v809
        %v811 = vpop.f32.mrb[0].mxu0
        %v812 = vadd.f32 0.0, %v811
        %813 = vmatprep.mubr.f32.mxu0 0.0
        %814 = vmatmul.mubr.f32.gmra.mrb[0].mxu0 %v658
        %v815 = vpop.f32.mrb[0].mxu0
        %v816 = vadd.f32 0.0, %v815
        %v817 = vpop.f32.mrb[0].mxu0
        %v818 = vadd.f32 0.0, %v817
        %819 = vdwg.mxu0
        %v820 = vmul.f32 %v726, %v726
        %v821 = vmul.f32 %v728, %v728
        %v822 = vmul.f32 %v732, %v732
        %v823 = vmul.f32 %v734, %v734
        %v824 = vmul.f32 %v738, %v738
        %v825 = vmul.f32 %v740, %v740
        %v826 = vmul.f32 %v744, %v744
        %v827 = vmul.f32 %v746, %v746
        %v828 = vmul.f32 %v750, %v750
        %v829 = vmul.f32 %v752, %v752
        %v830 = vmul.f32 %v756, %v756
        %v831 = vmul.f32 %v758, %v758
        %v832 = vmul.f32 %v762, %v762
        %v833 = vmul.f32 %v764, %v764
        %v834 = vmul.f32 %v768, %v768
        %v835 = vmul.f32 %v770, %v770
        %v836 = vmul.f32 %v774, %v774
        %v837 = vmul.f32 %v776, %v776
        %v838 = vmul.f32 %v780, %v780
        %v839 = vmul.f32 %v782, %v782
        %v840 = vmul.f32 %v786, %v786
        %v841 = vmul.f32 %v788, %v788
        %v842 = vmul.f32 %v792, %v792
        %v843 = vmul.f32 %v794, %v794
        %v844 = vmul.f32 %v798, %v798
        %v845 = vmul.f32 %v800, %v800
        %v846 = vmul.f32 %v804, %v804
        %v847 = vmul.f32 %v806, %v806
        %v848 = vmul.f32 %v810, %v810
        %v849 = vmul.f32 %v812, %v812
        %v850 = vmul.f32 %v816, %v816
        %v851 = vmul.f32 %v818, %v818
        %v852 = vadd.f32 %v820, %v822
        %v853 = vadd.f32 %v852, %v824
        %v854 = vadd.f32 %v853, %v826
        %v855 = vadd.f32 %v854, %v828
        %v856 = vadd.f32 %v855, %v830
        %v857 = vadd.f32 %v856, %v832
        %v858 = vadd.f32 %v857, %v834
        %v859 = vadd.f32 %v858, %v836
        %v860 = vadd.f32 %v859, %v838
        %v861 = vadd.f32 %v860, %v840
        %v862 = vadd.f32 %v861, %v842
        %v863 = vadd.f32 %v862, %v844
        %v864 = vadd.f32 %v863, %v846
        %v865 = vadd.f32 %v864, %v848
        %v866 = vadd.f32 %v865, %v850
        %v867 = vrot.slane %v866, 4
        %v868 = vadd.f32 %v866, %v867
        %v869 = vrot.slane %v868, 2
        %v870 = vadd.f32 %v868, %v869
        %v871 = vrot.slane %v870, 1
        %v872 = vadd.f32 %v870, %v871
        %v873 = vadd.f32 %v821, %v823
        %v874 = vadd.f32 %v873, %v825
        %v875 = vadd.f32 %v874, %v827
        %v876 = vadd.f32 %v875, %v829
        %v877 = vadd.f32 %v876, %v831
        %v878 = vadd.f32 %v877, %v833
        %v879 = vadd.f32 %v878, %v835
        %v880 = vadd.f32 %v879, %v837
        %v881 = vadd.f32 %v880, %v839
        %v882 = vadd.f32 %v881, %v841
        %v883 = vadd.f32 %v882, %v843
        %v884 = vadd.f32 %v883, %v845
        %v885 = vadd.f32 %v884, %v847
        %v886 = vadd.f32 %v885, %v849
        %v887 = vadd.f32 %v886, %v851
        %v888 = vrot.slane %v887, 4
        %v889 = vadd.f32 %v887, %v888
        %v890 = vrot.slane %v889, 2
        %v891 = vadd.f32 %v889, %v890
        %v892 = vrot.slane %v891, 1
        %v893 = vadd.f32 %v891, %v892
        %v894 = vsub.f32 %v872, %v850
        %v895 = vsub.f32 %v893, %v851
        %v896 = vsub.f32 %v894, %v816
        %v897 = vsub.f32 %v895, %v818
        %v898 = vmul.f32 %v896, 0.5
        %v899 = vmul.f32 %v897, 0.5
        %v902 = vcombine.high %v898, %v899
        %v904 = vunpack.c.l.s4 1966171168
        %v905 = vunpack.c.0.s8 %v904
        %v906 = vlaneseq
        %v907 = vshrl.u32 %v906, 7
        %v908 = vsub.s32 %v905, %v907
        %v909 = vrot.slane %v902, %v908
        %v910 = vcombine.high %v909, %v909
        %v912 = vunpack.c.l.s4 1966171168
        %v913 = vunpack.c.0.s8 %v912
        %v914 = vlaneseq
        %v915 = vshrl.u32 %v914, 7
        %v916 = vsub.s32 %v913, %v915
        %v917 = vrot.slane %v910, %v916
        %v918 = vcombine.high %v917, %v917
        %v920 = vlaneseq
        %vm921 = vcmp.ge.s32.totalorder %v920, 0
        %vm922 = vcmp.lt.s32.totalorder %v920, 256
        %vm923 = vmand %vm921, %vm922
        %924 = vst.msk [vmem:[%s174] sm:$0x3] %vm923, %v918
        %s925 = sand.u32 %s75, 1
        %s926 = scalar_lea.sflag [#allocation4], %s925
        %s927 = sand.u32 %s75, 1
        %s928 = smul.addr %s927, 2
        %s929 = scalar_lea.vmem [#allocation7], %s928
        // Predicated region
        $region37: #{tpu_custom_call.1} parent=27 // pred_check
          %p930 = pneg %p85
        $region38: #{tpu_custom_call.1} parent=27 // pred_check_branch
          %932 = sbr.rel (%p930) target = $region40
        $region39: #{tpu_custom_call.1} parent=27 // pred_region
          %s933 = smul.u32 2, %s20
          %s935 = ssub.s32 32, 32
          %936 = vsyncadd %s926, %s935
          %s937 = smul.addr %s933, 16
          %s938 = scalar_lea.hbm %s2, %s937
          %s940 = sshll.u32 %s929, 4
          %s941 = int_to_ptr.vmem [resolvable:$true] %s940
          %943 = dma.vmem_to_hbm [thread:$0]  %s941, 32, %s938, %s926
        $region40: #{tpu_custom_call.1} parent=27 // pred_fallthru
          _
      $region28: #{tpu_custom_call.1} parent=5 // pred_fallthru
        _
      %p944 = scmp.le.s32.totalorder 2, %s15
      // Predicated region
      $region41: #{tpu_custom_call.1} parent=5 // pred_check
        %p945 = pneg %p944
      $region42: #{tpu_custom_call.1} parent=5 // pred_check_branch
        %947 = sbr.rel (%p945) target = $region44
      $region43: #{tpu_custom_call.1} parent=5 // pred_region
        %s948 = ssub.s32 %s15, 2
        // Predicated region
        $region45: #{tpu_custom_call.1} parent=43 // pred_check
          %p949 = pneg %p91
        $region46: #{tpu_custom_call.1} parent=43 // pred_check_branch
          %951 = sbr.rel (%p949) target = $region48
        $region47: #{tpu_custom_call.1} parent=43 // pred_region
          %s952 = sand.u32 %s76, 1
          %s953 = scalar_lea.sflag [#allocation4], %s952
          %s954 = sand.u32 %s76, 1
          %s955 = smul.addr %s954, 2
          %s956 = scalar_lea.vmem [#allocation7], %s955
          %957 = dma.done %s953, 32
        $region48: #{tpu_custom_call.1} parent=43 // pred_fallthru
          _
      $region44: #{tpu_custom_call.1} parent=5 // pred_fallthru
        _
    $region6: #{tpu_custom_call.1} parent=1 // loop_footer
      %s19 = sadd.s32 1, %s15
    $region7: #{tpu_custom_call.1} parent=1 // loop_footer_branch
      %14 = sbr.rel target = $region3
    $region8: #{tpu_custom_call.1} parent=1 // loop_exit
      _
    %958 = vsyncpa [#allocation3], 1
    %s959 = scalar_lea.sflag [#allocation3], 1
    %960 = vsyncpa %s959, 1
    %961 = vsyncpa [#allocation6], 1
    %962 = vsyncpa [#allocation4], 1
    %s963 = scalar_lea.sflag [#allocation4], 1
    %964 = vsyncpa %s963, 1

</llo_original>
